<compile_context>
chip_gen: v7x
topology: tpu7x:2x2x1
jax: 0.10.0
libtpu: 0.0.40
codegen_flags: <defaults>
</compile_context>

<pallas_src>
import functools
import math

import jax
import jax.numpy as jnp
from jax.experimental import pallas as pl
from jax.experimental.pallas import tpu as pltpu


def _mematt_kernel(mi_t_ref, qi_ref, mo_ref, qo_ref, p_ref, out_ref,
                   *, scale, d_o, use_bf16):
    """One (batch, query-column-tile) grid step.

    mi_t_ref : (THW, D_e)     memory keys, pre-transposed (contraction dim in lanes)
    qi_ref   : (D_e, TQ)      query-key column tile
    mo_ref   : (D_o, THW)     memory values (full per batch)
    qo_ref   : (D_oq, TQ)     query-value column tile (copied into output)
    p_ref    : (THW, TQ)      attention weights output tile
    out_ref  : (D_o+D_oq, TQ) concatenated [mem, q_out] output tile
    """
    mi_t = mi_t_ref[...]
    qi = qi_ref[...]
    mo = mo_ref[...]

    if use_bf16:
        mi_t = mi_t.astype(jnp.bfloat16)
        qi = qi.astype(jnp.bfloat16)
        mo = mo.astype(jnp.bfloat16)

    # logits[k, q] = sum_d mi[d, k] * qi[d, q]   (MXU, f32 accumulation)
    logits = jnp.dot(mi_t, qi, preferred_element_type=jnp.float32) * scale  # (THW, TQ)

    # Column-wise softmax over THW (== torch F.softmax(p, dim=1)); f32 VPU/EUP math.
    logits = logits - jnp.max(logits, axis=0, keepdims=True)
    e = jnp.exp(logits)
    denom = jnp.sum(e, axis=0, keepdims=True)
    p = e * pl.reciprocal(denom, approx=use_bf16)

    p_ref[...] = p.astype(p_ref.dtype)

    # mem[d, q] = sum_k mo[d, k] * p[k, q]
    rhs = p.astype(jnp.bfloat16) if use_bf16 else p
    mem = jnp.dot(mo, rhs, preferred_element_type=jnp.float32)   # (D_o, TQ)

    out_ref[:d_o, :] = mem.astype(out_ref.dtype)
    out_ref[d_o:, :] = qo_ref[...].astype(out_ref.dtype)


def _pick_col_tile(hw):
    # Largest lane-dense (multiple-of-128) tile <= 512 that divides HW; otherwise fall
    # back to the full extent (full-dim blocks are exempt from the (8,128) rule).
    for tq in (512, 384, 256, 128):
        if hw % tq == 0:
            return tq
    return hw


def mem_att(m_in, m_out, q_in, q_out, *, use_bf16=True, p_dtype=jnp.float32):
    """Pallas implementation of MemAtt.forward. Returns (mem_out, p)."""
    B, T, D_e, H, W = m_in.shape
    _, _, D_o, _, _ = m_out.shape
    D_oq = q_out.shape[1]
    THW, HW = T * H * W, H * W

    # Wrapper-side layout plumbing: reproduce torch's raw .view, then put the
    # contraction dim of the memory keys in lanes (avoids an in-kernel XLU transpose).
    mi_t = jnp.swapaxes(m_in.reshape(B, D_e, THW), 1, 2)   # (B, THW, D_e)
    qi = q_in.reshape(B, D_e, HW)                          # (B, D_e, HW)
    mo = m_out.reshape(B, D_o, THW)                        # (B, D_o, THW)
    qo = q_out.reshape(B, D_oq, HW)                        # (B, D_oq, HW)

    TQ = _pick_col_tile(HW)
    NQ = HW // TQ

    out_dtype = jnp.result_type(m_out.dtype, q_out.dtype)

    # Double-buffered VMEM footprint estimate -> explicit scoped-VMEM limit.
    est = 2 * (THW * D_e * mi_t.dtype.itemsize
               + D_e * TQ * qi.dtype.itemsize
               + D_o * THW * mo.dtype.itemsize
               + D_oq * TQ * qo.dtype.itemsize
               + THW * TQ * jnp.dtype(p_dtype).itemsize
               + (D_o + D_oq) * TQ * jnp.dtype(out_dtype).itemsize)
    vmem_limit = int(min(max(1.5 * est + (4 << 20), 32 << 20), 128 << 20))

    kernel = functools.partial(_mematt_kernel, scale=1.0 / math.sqrt(D_e),
                               d_o=D_o, use_bf16=use_bf16)

    p, out_flat = pl.pallas_call(
        kernel,
        out_shape=(
            jax.ShapeDtypeStruct((B, THW, HW), p_dtype),              # p
            jax.ShapeDtypeStruct((B, D_o + D_oq, HW), out_dtype),     # [mem, q_out]
        ),
        grid=(B, NQ),
        in_specs=[
            pl.BlockSpec((None, THW, D_e), lambda b, j: (b, 0, 0)),   # mi_t (per batch)
            pl.BlockSpec((None, D_e, TQ), lambda b, j: (b, 0, j)),    # qi column tile
            pl.BlockSpec((None, D_o, THW), lambda b, j: (b, 0, 0)),   # mo (per batch)
            pl.BlockSpec((None, D_oq, TQ), lambda b, j: (b, 0, j)),   # q_out column tile
        ],
        out_specs=(
            pl.BlockSpec((None, THW, TQ), lambda b, j: (b, 0, j)),
            pl.BlockSpec((None, D_o + D_oq, TQ), lambda b, j: (b, 0, j)),
        ),
        compiler_params=pltpu.CompilerParams(
            dimension_semantics=("parallel", "parallel"),
            vmem_limit_bytes=vmem_limit,
        ),
    )(mi_t, qi, mo, qo)

    mem_out = out_flat.reshape(B, D_o + D_oq, H, W)   # free reshape of last dims
    return mem_out, p


def _reference(m_in, m_out, q_in, q_out):
    """Pure-JAX reference reproducing the torch forward verbatim."""
    B, T, D_e, H, W = m_in.shape
    _, _, D_o, _, _ = m_out.shape
    mi = m_in.reshape(B, D_e, T * H * W)
    mi = jnp.swapaxes(mi, 1, 2)
    qi = q_in.reshape(B, D_e, H * W)
    p = jnp.einsum("bkd,bdq->bkq", mi, qi) / math.sqrt(D_e)
    p = jax.nn.softmax(p, axis=1)
    mo = m_out.reshape(B, D_o, T * H * W)
    mem = jnp.einsum("bdk,bkq->bdq", mo, p)
    mem = mem.reshape(B, D_o, H, W)
    mem_out = jnp.concatenate([mem, q_out], axis=1)
    return mem_out, p


if __name__ == "__main__":
    # MemAtt declares no learnable parameters, so only inputs are needed.
    B, T, D_e, D_o, H, W = 2, 2, 32, 32, 16, 16   # HW=256 -> two lane-dense 128-col tiles
    key = jax.random.PRNGKey(0)
    k1, k2, k3, k4 = jax.random.split(key, 4)
    m_in = jax.random.normal(k1, (B, T, D_e, H, W), dtype=jnp.float32)
    m_out = jax.random.normal(k2, (B, T, D_o, H, W), dtype=jnp.float32)
    q_in = jax.random.normal(k3, (B, D_e, H, W), dtype=jnp.float32)
    q_out = jax.random.normal(k4, (B, D_o, H, W), dtype=jnp.float32)

    ref_mem_out, ref_p = _reference(m_in, m_out, q_in, q_out)

    # Exact-math path: validates kernel structure against the f32 reference.
    mem_out_f32, p_f32 = jax.block_until_ready(
        mem_att(m_in, m_out, q_in, q_out, use_bf16=False))
    assert p_f32.shape == ref_p.shape and mem_out_f32.shape == ref_mem_out.shape
    assert jnp.allclose(p_f32, ref_p, atol=1e-5, rtol=1e-5)
    assert jnp.allclose(mem_out_f32, ref_mem_out, atol=1e-4, rtol=1e-4)

    # Default fast path (bf16 MXU feeds + approx reciprocal): relaxed tolerances.
    mem_out, p = jax.block_until_ready(mem_att(m_in, m_out, q_in, q_out))
    assert jnp.allclose(p, ref_p, atol=5e-3, rtol=5e-2)
    assert jnp.allclose(mem_out, ref_mem_out, atol=2e-2, rtol=5e-2)

    print("KERNEL_OK")
</pallas_src>

<mosaic_0001>
module attributes {stable_mosaic.version = 11 : i64} {
  func.func @_mematt_kernel(%arg0: i32, %arg1: i32, %arg2: memref<1x512x32xf32, #tpu.memory_space<vmem>>, %arg3: memref<1x32x256xf32, #tpu.memory_space<vmem>>, %arg4: memref<1x32x512xf32, #tpu.memory_space<vmem>>, %arg5: memref<1x32x256xf32, #tpu.memory_space<vmem>>, %arg6: memref<1x512x256xf32, #tpu.memory_space<vmem>>, %arg7: memref<1x64x256xf32, #tpu.memory_space<vmem>>) attributes {dimension_semantics = [#tpu.dimension_semantics<parallel>, #tpu.dimension_semantics<parallel>], iteration_bounds = array<i64: 2, 1>, scalar_prefetch = 0 : i64, scratch_operands = 0 : i64, tpu.core_type = #tpu.core_type<tc>, window_params = [{transform_indices = @transform_0, window_bounds = array<i64: 1, 512, 32>}, {transform_indices = @transform_1, window_bounds = array<i64: 1, 32, 256>}, {transform_indices = @transform_2, window_bounds = array<i64: 1, 32, 512>}, {transform_indices = @transform_3, window_bounds = array<i64: 1, 32, 256>}, {transform_indices = @transform_4, window_bounds = array<i64: 1, 512, 256>}, {transform_indices = @transform_5, window_bounds = array<i64: 1, 64, 256>}]} {
    %c0 = arith.constant 0 : index
    %c0_0 = arith.constant 0 : index
    %c0_1 = arith.constant 0 : index
    %0 = vector.load %arg2[%c0, %c0_0, %c0_1] : memref<1x512x32xf32, #tpu.memory_space<vmem>>, vector<1x512x32xf32>
    %1 = vector.shape_cast %0 : vector<1x512x32xf32> to vector<512x32xf32>
    %c0_2 = arith.constant 0 : index
    %c0_3 = arith.constant 0 : index
    %c0_4 = arith.constant 0 : index
    %2 = vector.load %arg3[%c0_2, %c0_3, %c0_4] : memref<1x32x256xf32, #tpu.memory_space<vmem>>, vector<1x32x256xf32>
    %3 = vector.shape_cast %2 : vector<1x32x256xf32> to vector<32x256xf32>
    %c0_5 = arith.constant 0 : index
    %c0_6 = arith.constant 0 : index
    %c0_7 = arith.constant 0 : index
    %4 = vector.load %arg4[%c0_5, %c0_6, %c0_7] : memref<1x32x512xf32, #tpu.memory_space<vmem>>, vector<1x32x512xf32>
    %5 = vector.shape_cast %4 : vector<1x32x512xf32> to vector<32x512xf32>
    %cst = arith.constant dense<0.000000e+00> : vector<512x256xf32>
    %6 = tpu.matmul %1, %3, %cst {dimension_numbers = #tpu.dot_dimension_numbers<[1], [0], [0], [1], [0, 0, 1, 1], [], []>} : vector<512x32xf32>, vector<32x256xf32>, vector<512x256xf32> -> vector<512x256xf32>
    %cst_8 = arith.constant 0.176776692 : f32
    %7 = vector.broadcast %cst_8 : f32 to vector<512x256xf32>
    %8 = arith.mulf %6, %7 : vector<512x256xf32>
    %cst_9 = arith.constant dense<0xFF800000> : vector<256xf32>
    %9 = vector.multi_reduction <maximumf>, %8, %cst_9 [0] : vector<512x256xf32> to vector<256xf32>
    %10 = vector.shape_cast %9 : vector<256xf32> to vector<1x256xf32>
    %11 = vector.broadcast %10 : vector<1x256xf32> to vector<512x256xf32>
    %12 = arith.subf %8, %11 : vector<512x256xf32>
    %13 = math.exp %12 : vector<512x256xf32>
    %cst_10 = arith.constant dense<0.000000e+00> : vector<256xf32>
    %14 = vector.multi_reduction <add>, %13, %cst_10 [0] : vector<512x256xf32> to vector<256xf32>
    %15 = vector.shape_cast %14 : vector<256xf32> to vector<1x256xf32>
    %16 = tpu.reciprocal %15 : vector<1x256xf32> -> vector<1x256xf32>
    %17 = vector.broadcast %16 : vector<1x256xf32> to vector<512x256xf32>
    %18 = arith.mulf %13, %17 : vector<512x256xf32>
    %c0_11 = arith.constant 0 : index
    %c0_12 = arith.constant 0 : index
    %c0_13 = arith.constant 0 : index
    %19 = vector.load %arg6[%c0_11, %c0_12, %c0_13] : memref<1x512x256xf32, #tpu.memory_space<vmem>>, vector<1x512x256xf32>
    %20 = vector.shape_cast %19 : vector<1x512x256xf32> to vector<512x256xf32>
    %21 = vector.shape_cast %18 : vector<512x256xf32> to vector<1x512x256xf32>
    tpu.vector_store %arg6[%c0_11, %c0_12, %c0_13], %21 {strides = array<i32>} : memref<1x512x256xf32, #tpu.memory_space<vmem>>, vector<1x512x256xf32>,
    %cst_14 = arith.constant dense<0.000000e+00> : vector<32x256xf32>
    %22 = tpu.matmul %5, %18, %cst_14 {dimension_numbers = #tpu.dot_dimension_numbers<[1], [0], [0], [1], [0, 0, 1, 1], [], []>} : vector<32x512xf32>, vector<512x256xf32>, vector<32x256xf32> -> vector<32x256xf32>
    %c0_15 = arith.constant 0 : index
    %c0_16 = arith.constant 0 : index
    %c0_17 = arith.constant 0 : index
    %23 = vector.load %arg7[%c0_15, %c0_16, %c0_17] : memref<1x64x256xf32, #tpu.memory_space<vmem>>, vector<1x32x256xf32>
    %24 = vector.shape_cast %23 : vector<1x32x256xf32> to vector<32x256xf32>
    %25 = vector.shape_cast %22 : vector<32x256xf32> to vector<1x32x256xf32>
    tpu.vector_store %arg7[%c0_15, %c0_16, %c0_17], %25 {strides = array<i32>} : memref<1x64x256xf32, #tpu.memory_space<vmem>>, vector<1x32x256xf32>,
    %c0_18 = arith.constant 0 : index
    %c0_19 = arith.constant 0 : index
    %c0_20 = arith.constant 0 : index
    %26 = vector.load %arg5[%c0_18, %c0_19, %c0_20] : memref<1x32x256xf32, #tpu.memory_space<vmem>>, vector<1x32x256xf32>
    %27 = vector.shape_cast %26 : vector<1x32x256xf32> to vector<32x256xf32>
    %c0_21 = arith.constant 0 : index
    %c32 = arith.constant 32 : index
    %c0_22 = arith.constant 0 : index
    %28 = vector.load %arg7[%c0_21, %c32, %c0_22] : memref<1x64x256xf32, #tpu.memory_space<vmem>>, vector<1x32x256xf32>
    %29 = vector.shape_cast %28 : vector<1x32x256xf32> to vector<32x256xf32>
    %30 = vector.shape_cast %27 : vector<32x256xf32> to vector<1x32x256xf32>
    tpu.vector_store %arg7[%c0_21, %c32, %c0_22], %30 {strides = array<i32>} : memref<1x64x256xf32, #tpu.memory_space<vmem>>, vector<1x32x256xf32>,
    return
  }
  func.func @transform_0(%arg0: i32, %arg1: i32) -> (i32, i32, i32) {
    %c0_i32 = arith.constant 0 : i32
    %c0_i32_0 = arith.constant 0 : i32
    %c0_i32_1 = arith.constant 0 : i32
    return %arg0, %c0_i32, %c0_i32_0 : i32, i32, i32
  }
  func.func @transform_1(%arg0: i32, %arg1: i32) -> (i32, i32, i32) {
    %c0_i32 = arith.constant 0 : i32
    %c0_i32_0 = arith.constant 0 : i32
    return %arg0, %c0_i32, %arg1 : i32, i32, i32
  }
  func.func @transform_2(%arg0: i32, %arg1: i32) -> (i32, i32, i32) {
    %c0_i32 = arith.constant 0 : i32
    %c0_i32_0 = arith.constant 0 : i32
    %c0_i32_1 = arith.constant 0 : i32
    return %arg0, %c0_i32, %c0_i32_0 : i32, i32, i32
  }
  func.func @transform_3(%arg0: i32, %arg1: i32) -> (i32, i32, i32) {
    %c0_i32 = arith.constant 0 : i32
    %c0_i32_0 = arith.constant 0 : i32
    return %arg0, %c0_i32, %arg1 : i32, i32, i32
  }
  func.func @transform_4(%arg0: i32, %arg1: i32) -> (i32, i32, i32) {
    %c0_i32 = arith.constant 0 : i32
    %c0_i32_0 = arith.constant 0 : i32
    return %arg0, %c0_i32, %arg1 : i32, i32, i32
  }
  func.func @transform_5(%arg0: i32, %arg1: i32) -> (i32, i32, i32) {
    %c0_i32 = arith.constant 0 : i32
    %c0_i32_0 = arith.constant 0 : i32
    return %arg0, %c0_i32, %arg1 : i32, i32, i32
  }
}

</mosaic_0001>

<llo_original>
// kernel: tpu_custom_call.1
$region0: #{tpu_custom_call.1}
  #allocation0 [shape = 'u32[]', space=smem, size = 0x4, offset = 0x4, fixed_abs, tag = 'smem constant byte address 0x4 - core index']
  #allocation1 [shape = 'u32[144,128]{1,0:T(1,128)}', space=vmem, size = 0x12000, scoped, tag = 'internal scratch']
  %s0 = inlined_call_operand.vmem [shape: f32[2,512,32], index: 0, kind: input, shape index: {}]
  %s1 = inlined_call_operand.vmem [shape: f32[2,32,256], index: 1, kind: input, shape index: {}]
  %s2 = inlined_call_operand.vmem [shape: f32[2,32,512], index: 2, kind: input, shape index: {}]
  %s3 = inlined_call_operand.vmem [shape: f32[2,32,256], index: 3, kind: input, shape index: {}]
  %s4 = inlined_call_operand.hbm [shape: f32[2,512,256], index: 4, kind: output, shape index: {0}]
  %s5 = inlined_call_operand.hbm [shape: f32[2,64,256], index: 5, kind: output, shape index: {1}]
  %6 = xla_tuple %s4, %s5
  %s7 = sld [smem:[#allocation0]]
  $region57: #{tpu_custom_call.1} parent=0
    _
  %s9 = ssub.s32 1, %s7
  %s10 = scalar_select 0, %s9, %s7
  $region1: #{tpu_custom_call.1} parent=0
    #allocation2 [shape = 'u8[1048576]{0}', space=vmem, size = 0x100000, scoped, tag = 'output window, operand 0']
    #allocation3 [shape = 's32[2]{0}', space=sflag, size = 0x8, scoped, tag = 'scoped memory for tpu_custom_call.1']
    #allocation4 [shape = 'u8[131072]{0}', space=vmem, size = 0x20000, scoped, tag = 'output window, operand 1']
    #allocation5 [shape = 's32[2]{0}', space=sflag, size = 0x8, scoped, tag = 'scoped memory for tpu_custom_call.1']
    %11 = vsyncpa [#allocation3], 0
    %s12 = scalar_lea.sflag [#allocation3], 1
    %13 = vsyncpa %s12, 0
    %14 = vsyncpa [#allocation5], 0
    %s15 = scalar_lea.sflag [#allocation5], 1
    %16 = vsyncpa %s15, 0
    loop: start=0, step=1, limit=4
    $region2: #{tpu_custom_call.1} parent=1 // loop_pre_header
      _
    $region3: #{tpu_custom_call.1} parent=1 // loop_header
      %s18 = sphi 0, %s22
      %p19 = scmp.ge.s32.totalorder %s18, 4
      %s25 = sphi 0, %s37
      %s26 = sphi 0, %s33
      %s27 = sphi 0, %s25
      %s28 = sphi 0, %s26
      %s29 = sphi 0, %s27
      %s30 = sphi 0, %s28
      %s40 = sphi 0, %s42
      %s43 = sphi 0, %s40
      %s44 = sphi 0, %s43
      %s60 = sphi 0, %s44
      %s68 = sphi 0, %s70
      %s71 = sphi 0, %s68
      %s72 = sphi 0, %s71
      %s88 = sphi 0, %s72
      %s94 = sphi 0, %s96
      %s97 = sphi 0, %s94
      %s98 = sphi 0, %s97
      %s114 = sphi 0, %s98
      %s122 = sphi 0, %s124
      %s125 = sphi 0, %s122
      %s126 = sphi 0, %s125
      %s142 = sphi 0, %s126
      %s150 = sphi 0, %s152
      %s153 = sphi 0, %s150
      %s154 = sphi 0, %s153
      %s170 = sphi 0, %s154
      %s178 = sphi 0, %s180
      %s181 = sphi 0, %s178
      %s182 = sphi 0, %s181
      %s198 = sphi 0, %s182
    $region4: #{tpu_custom_call.1} parent=1 // loop_header_branch
      %21 = sbr.rel (%p19) target = $region8
    $region5: #{tpu_custom_call.1} parent=1 // loop_body
      %s23 = ssub.s32 %s18, 1
      %s24 = ssub.s32 %s18, 2
      %s31 = sadd.s32 1, %s26
      %p32 = scmp.ge.s32.totalorder %s31, 1
      %s33 = scalar_select %p32, 0, %s31
      %s34 = sadd.s32 1, %s25
      %s35 = scalar_select %p32, %s34, %s25
      %p36 = scmp.ge.s32.totalorder %s35, 2
      %s37 = scalar_select %p36, 0, %s35
      %s38 = ssub.s32 %s25, %s37
      %p39 = scmp.eq.s32.totalorder %s38, 0
      %s41 = sadd.s32 %s40, 1
      %s42 = scalar_select %p39, %s40, %s41
      %p45 = pneg %p39
      %p46 = scmp.eq.s32.totalorder %s18, 1
      %p47 = por %p45, %p46
      %p48 = scmp.ne.s32.totalorder %s40, %s43
      %p49 = scmp.eq.s32.totalorder %s18, 0
      %p50 = por %p48, %p49
      %p51 = scmp.ne.s32.totalorder %s40, %s43
      %p52 = scmp.eq.s32.totalorder %s23, 1
      %p53 = por %p51, %p52
      %p54 = scmp.ne.s32.totalorder %s43, %s44
      %p55 = scmp.eq.s32.totalorder %s23, 0
      %p56 = por %p54, %p55
      %p57 = scmp.ne.s32.totalorder %s43, %s44
      %p58 = scmp.eq.s32.totalorder %s24, 1
      %p59 = por %p57, %p58
      %p61 = scmp.ne.s32.totalorder %s44, %s60
      %p62 = scmp.eq.s32.totalorder %s24, 0
      %p63 = por %p61, %p62
      %s64 = ssub.s32 %s25, %s37
      %s65 = ssub.s32 %s26, %s33
      %s66 = sor.u32 %s64, %s65
      %p67 = scmp.eq.s32.totalorder %s66, 0
      %s69 = sadd.s32 %s68, 1
      %s70 = scalar_select %p67, %s68, %s69
      %p73 = pneg %p67
      %p74 = scmp.eq.s32.totalorder %s18, 1
      %p75 = por %p73, %p74
      %p76 = scmp.ne.s32.totalorder %s68, %s71
      %p77 = scmp.eq.s32.totalorder %s18, 0
      %p78 = por %p76, %p77
      %p79 = scmp.ne.s32.totalorder %s68, %s71
      %p80 = scmp.eq.s32.totalorder %s23, 1
      %p81 = por %p79, %p80
      %p82 = scmp.ne.s32.totalorder %s71, %s72
      %p83 = scmp.eq.s32.totalorder %s23, 0
      %p84 = por %p82, %p83
      %p85 = scmp.ne.s32.totalorder %s71, %s72
      %p86 = scmp.eq.s32.totalorder %s24, 1
      %p87 = por %p85, %p86
      %p89 = scmp.ne.s32.totalorder %s72, %s88
      %p90 = scmp.eq.s32.totalorder %s24, 0
      %p91 = por %p89, %p90
      %s92 = ssub.s32 %s25, %s37
      %p93 = scmp.eq.s32.totalorder %s92, 0
      %s95 = sadd.s32 %s94, 1
      %s96 = scalar_select %p93, %s94, %s95
      %p99 = pneg %p93
      %p100 = scmp.eq.s32.totalorder %s18, 1
      %p101 = por %p99, %p100
      %p102 = scmp.ne.s32.totalorder %s94, %s97
      %p103 = scmp.eq.s32.totalorder %s18, 0
      %p104 = por %p102, %p103
      %p105 = scmp.ne.s32.totalorder %s94, %s97
      %p106 = scmp.eq.s32.totalorder %s23, 1
      %p107 = por %p105, %p106
      %p108 = scmp.ne.s32.totalorder %s97, %s98
      %p109 = scmp.eq.s32.totalorder %s23, 0
      %p110 = por %p108, %p109
      %p111 = scmp.ne.s32.totalorder %s97, %s98
      %p112 = scmp.eq.s32.totalorder %s24, 1
      %p113 = por %p111, %p112
      %p115 = scmp.ne.s32.totalorder %s98, %s114
      %p116 = scmp.eq.s32.totalorder %s24, 0
      %p117 = por %p115, %p116
      %s118 = ssub.s32 %s25, %s37
      %s119 = ssub.s32 %s26, %s33
      %s120 = sor.u32 %s118, %s119
      %p121 = scmp.eq.s32.totalorder %s120, 0
      %s123 = sadd.s32 %s122, 1
      %s124 = scalar_select %p121, %s122, %s123
      %p127 = pneg %p121
      %p128 = scmp.eq.s32.totalorder %s18, 1
      %p129 = por %p127, %p128
      %p130 = scmp.ne.s32.totalorder %s122, %s125
      %p131 = scmp.eq.s32.totalorder %s18, 0
      %p132 = por %p130, %p131
      %p133 = scmp.ne.s32.totalorder %s122, %s125
      %p134 = scmp.eq.s32.totalorder %s23, 1
      %p135 = por %p133, %p134
      %p136 = scmp.ne.s32.totalorder %s125, %s126
      %p137 = scmp.eq.s32.totalorder %s23, 0
      %p138 = por %p136, %p137
      %p139 = scmp.ne.s32.totalorder %s125, %s126
      %p140 = scmp.eq.s32.totalorder %s24, 1
      %p141 = por %p139, %p140
      %p143 = scmp.ne.s32.totalorder %s126, %s142
      %p144 = scmp.eq.s32.totalorder %s24, 0
      %p145 = por %p143, %p144
      %s146 = ssub.s32 %s25, %s37
      %s147 = ssub.s32 %s26, %s33
      %s148 = sor.u32 %s146, %s147
      %p149 = scmp.eq.s32.totalorder %s148, 0
      %s151 = sadd.s32 %s150, 1
      %s152 = scalar_select %p149, %s150, %s151
      %p155 = pneg %p149
      %p156 = scmp.eq.s32.totalorder %s18, 1
      %p157 = por %p155, %p156
      %p158 = scmp.ne.s32.totalorder %s150, %s153
      %p159 = scmp.eq.s32.totalorder %s18, 0
      %p160 = por %p158, %p159
      %p161 = scmp.ne.s32.totalorder %s150, %s153
      %p162 = scmp.eq.s32.totalorder %s23, 1
      %p163 = por %p161, %p162
      %p164 = scmp.ne.s32.totalorder %s153, %s154
      %p165 = scmp.eq.s32.totalorder %s23, 0
      %p166 = por %p164, %p165
      %p167 = scmp.ne.s32.totalorder %s153, %s154
      %p168 = scmp.eq.s32.totalorder %s24, 1
      %p169 = por %p167, %p168
      %p171 = scmp.ne.s32.totalorder %s154, %s170
      %p172 = scmp.eq.s32.totalorder %s24, 0
      %p173 = por %p171, %p172
      %s174 = ssub.s32 %s25, %s37
      %s175 = ssub.s32 %s26, %s33
      %s176 = sor.u32 %s174, %s175
      %p177 = scmp.eq.s32.totalorder %s176, 0
      %s179 = sadd.s32 %s178, 1
      %s180 = scalar_select %p177, %s178, %s179
      %p183 = pneg %p177
      %p184 = scmp.eq.s32.totalorder %s18, 1
      %p185 = por %p183, %p184
      %p186 = scmp.ne.s32.totalorder %s178, %s181
      %p187 = scmp.eq.s32.totalorder %s18, 0
      %p188 = por %p186, %p187
      %p189 = scmp.ne.s32.totalorder %s178, %s181
      %p190 = scmp.eq.s32.totalorder %s23, 1
      %p191 = por %p189, %p190
      %p192 = scmp.ne.s32.totalorder %s181, %s182
      %p193 = scmp.eq.s32.totalorder %s23, 0
      %p194 = por %p192, %p193
      %p195 = scmp.ne.s32.totalorder %s181, %s182
      %p196 = scmp.eq.s32.totalorder %s24, 1
      %p197 = por %p195, %p196
      %p199 = scmp.ne.s32.totalorder %s182, %s198
      %p200 = scmp.eq.s32.totalorder %s24, 0
      %p201 = por %p199, %p200
      %p202 = scmp.le.s32.totalorder 1, %s18
      %p203 = scmp.lt.s32.totalorder %s18, 3
      %p204 = pnand %p202, %p203
      %p205 = pneg %p204
      // Predicated region
      $region9: #{tpu_custom_call.1} parent=5 // pred_check
        _
      $region10: #{tpu_custom_call.1} parent=5 // pred_check_branch
        %207 = sbr.rel (%p204) target = $region12
      $region11: #{tpu_custom_call.1} parent=5 // pred_region
        %s208 = ssub.s32 %s18, 1
      $region12: #{tpu_custom_call.1} parent=5 // pred_fallthru
        _
      %p209 = scmp.lt.s32.totalorder %s18, 2
      // Predicated region
      $region13: #{tpu_custom_call.1} parent=5 // pred_check
        %p210 = pneg %p209
      $region14: #{tpu_custom_call.1} parent=5 // pred_check_branch
        %212 = sbr.rel (%p210) target = $region16
      $region15: #{tpu_custom_call.1} parent=5 // pred_region
        // Predicated region
        $region17: #{tpu_custom_call.1} parent=15 // pred_check
          %p213 = pneg %p50
        $region18: #{tpu_custom_call.1} parent=15 // pred_check_branch
          %215 = sbr.rel (%p213) target = $region20
        $region19: #{tpu_custom_call.1} parent=15 // pred_region
          %p216 = scmp.lt.s32.totalorder %s25, 1
          %s217 = scalar_select %p216, %s25, 1
          %s218 = smul.addr %s217, 64
          %s219 = smul.addr %s218, 8
          %s220 = scalar_lea.vmem %s0, %s219
        $region20: #{tpu_custom_call.1} parent=15 // pred_fallthru
          _
        // Predicated region
        $region21: #{tpu_custom_call.1} parent=15 // pred_check
          %p221 = pneg %p78
        $region22: #{tpu_custom_call.1} parent=15 // pred_check_branch
          %223 = sbr.rel (%p221) target = $region24
        $region23: #{tpu_custom_call.1} parent=15 // pred_region
          %s224 = smul.u32 2, %s26
          %p225 = scmp.lt.s32.totalorder %s25, 1
          %s226 = scalar_select %p225, %s25, 1
          %p227 = scmp.lt.s32.totalorder %s224, 1
          %s228 = scalar_select %p227, %s224, 1
          %s229 = smul.addr %s226, 8
          %s230 = sadd.s32 %s228, %s229
          %s231 = smul.addr %s230, 8
          %s232 = scalar_lea.vmem %s1, %s231
          %s233 = smul.u32 2, %s26
        $region24: #{tpu_custom_call.1} parent=15 // pred_fallthru
          _
        // Predicated region
        $region25: #{tpu_custom_call.1} parent=15 // pred_check
          %p234 = pneg %p104
        $region26: #{tpu_custom_call.1} parent=15 // pred_check_branch
          %236 = sbr.rel (%p234) target = $region28
        $region27: #{tpu_custom_call.1} parent=15 // pred_region
          %p237 = scmp.lt.s32.totalorder %s25, 1
          %s238 = scalar_select %p237, %s25, 1
          %s239 = smul.addr %s238, 16
          %s240 = smul.addr %s239, 8
          %s241 = scalar_lea.vmem %s2, %s240
        $region28: #{tpu_custom_call.1} parent=15 // pred_fallthru
          _
        // Predicated region
        $region29: #{tpu_custom_call.1} parent=15 // pred_check
          %p242 = pneg %p132
        $region30: #{tpu_custom_call.1} parent=15 // pred_check_branch
          %244 = sbr.rel (%p242) target = $region32
        $region31: #{tpu_custom_call.1} parent=15 // pred_region
          %s245 = smul.u32 2, %s26
          %p246 = scmp.lt.s32.totalorder %s25, 1
          %s247 = scalar_select %p246, %s25, 1
          %p248 = scmp.lt.s32.totalorder %s245, 1
          %s249 = scalar_select %p248, %s245, 1
          %s250 = smul.addr %s247, 8
          %s251 = sadd.s32 %s249, %s250
          %s252 = smul.addr %s251, 8
          %s253 = scalar_lea.vmem %s3, %s252
          %s254 = smul.u32 2, %s26
        $region32: #{tpu_custom_call.1} parent=15 // pred_fallthru
          _
      $region16: #{tpu_custom_call.1} parent=5 // pred_fallthru
        _
      %p255 = scmp.le.s32.totalorder 1, %s18
      %p256 = scmp.lt.s32.totalorder %s18, 3
      %p257 = pnand %p255, %p256
      %p258 = pneg %p257
      // Predicated region
      $region33: #{tpu_custom_call.1} parent=5 // pred_check
        _
      $region34: #{tpu_custom_call.1} parent=5 // pred_check_branch
        %260 = sbr.rel (%p257) target = $region36
      $region35: #{tpu_custom_call.1} parent=5 // pred_region
        %s261 = ssub.s32 %s18, 1
        %p262 = scmp.lt.s32.totalorder %s27, 1
        %s263 = scalar_select %p262, %s27, 1
        %s264 = smul.addr %s263, 64
        %s265 = smul.addr %s264, 8
        %s266 = scalar_lea.vmem %s0, %s265
        %p267 = pneg %p56
        %p268 = pneg %p53
        %s269 = smul.u32 2, %s28
        %p270 = scmp.lt.s32.totalorder %s27, 1
        %s271 = scalar_select %p270, %s27, 1
        %p272 = scmp.lt.s32.totalorder %s269, 1
        %s273 = scalar_select %p272, %s269, 1
        %s274 = smul.addr %s271, 8
        %s275 = sadd.s32 %s273, %s274
        %s276 = smul.addr %s275, 8
        %s277 = scalar_lea.vmem %s1, %s276
        %p278 = pneg %p84
        %p279 = pneg %p81
        %p280 = scmp.lt.s32.totalorder %s27, 1
        %s281 = scalar_select %p280, %s27, 1
        %s282 = smul.addr %s281, 16
        %s283 = smul.addr %s282, 8
        %s284 = scalar_lea.vmem %s2, %s283
        %p285 = pneg %p110
        %p286 = pneg %p107
        %s287 = smul.u32 2, %s28
        %p288 = scmp.lt.s32.totalorder %s27, 1
        %s289 = scalar_select %p288, %s27, 1
        %p290 = scmp.lt.s32.totalorder %s287, 1
        %s291 = scalar_select %p290, %s287, 1
        %s292 = smul.addr %s289, 8
        %s293 = sadd.s32 %s291, %s292
        %s294 = smul.addr %s293, 8
        %s295 = scalar_lea.vmem %s3, %s294
        %p296 = pneg %p138
        %p297 = pneg %p135
        %p298 = pneg %p166
        %p299 = pneg %p163
        %s300 = sand.u32 %s153, 1
        %s301 = scalar_lea.sflag [#allocation3], %s300
        %s302 = sand.u32 %s153, 1
        %s303 = smul.addr %s302, 1024
        %s304 = scalar_lea.vmem [#allocation2], %s303
        %p305 = pneg %p194
        %p306 = pneg %p191
        %s307 = sand.u32 %s181, 1
        %s308 = scalar_lea.sflag [#allocation5], %s307
        %s309 = sand.u32 %s181, 1
        %s310 = smul.addr %s309, 128
        %s311 = scalar_lea.vmem [#allocation4], %s310
        %p312 = scmp.lt.s32.totalorder %s27, 1
        %s313 = scalar_select %p312, %s27, 1
        %s314 = smul.addr %s313, 64
        %s315 = smul.addr %s314, 8
        %s316 = scalar_lea.vmem %s0, %s315
        %s317 = smul.u32 2, %s28
        %p318 = scmp.lt.s32.totalorder %s27, 1
        %s319 = scalar_select %p318, %s27, 1
        %p320 = scmp.lt.s32.totalorder %s317, 1
        %s321 = scalar_select %p320, %s317, 1
        %s322 = smul.addr %s319, 8
        %s323 = sadd.s32 %s321, %s322
        %s324 = smul.addr %s323, 8
        %s325 = scalar_lea.vmem %s1, %s324
        %s326 = smul.u32 2, %s28
        %p327 = scmp.lt.s32.totalorder %s27, 1
        %s328 = scalar_select %p327, %s27, 1
        %s329 = smul.addr %s328, 16
        %s330 = smul.addr %s329, 8
        %s331 = scalar_lea.vmem %s2, %s330
        %s332 = smul.u32 2, %s28
        %p333 = scmp.lt.s32.totalorder %s27, 1
        %s334 = scalar_select %p333, %s27, 1
        %p335 = scmp.lt.s32.totalorder %s332, 1
        %s336 = scalar_select %p335, %s332, 1
        %s337 = smul.addr %s334, 8
        %s338 = sadd.s32 %s336, %s337
        %s339 = smul.addr %s338, 8
        %s340 = scalar_lea.vmem %s3, %s339
        %s341 = smul.u32 2, %s28
        %s342 = smul.u32 2, %s28
        %s343 = smul.u32 2, %s28
        %v344 = vld [vmem:[%s316] sm:$0xff]
        %v345 = vld [vmem:[%s316 + $0x8] sm:$0xff]
        %v346 = vld [vmem:[%s316 + $0x10] sm:$0xff]
        %v347 = vld [vmem:[%s316 + $0x18] sm:$0xff]
        %v348 = vld [vmem:[%s316 + $0x20] sm:$0xff]
        %v349 = vld [vmem:[%s316 + $0x28] sm:$0xff]
        %v350 = vld [vmem:[%s316 + $0x30] sm:$0xff]
        %v351 = vld [vmem:[%s316 + $0x38] sm:$0xff]
        %v352 = vld [vmem:[%s316 + $0x40] sm:$0xff]
        %v353 = vld [vmem:[%s316 + $0x48] sm:$0xff]
        %v354 = vld [vmem:[%s316 + $0x50] sm:$0xff]
        %v355 = vld [vmem:[%s316 + $0x58] sm:$0xff]
        %v356 = vld [vmem:[%s316 + $0x60] sm:$0xff]
        %v357 = vld [vmem:[%s316 + $0x68] sm:$0xff]
        %v358 = vld [vmem:[%s316 + $0x70] sm:$0xff]
        %v359 = vld [vmem:[%s316 + $0x78] sm:$0xff]
        %v360 = vld [vmem:[%s316 + $0x80] sm:$0xff]
        %v361 = vld [vmem:[%s316 + $0x88] sm:$0xff]
        %v362 = vld [vmem:[%s316 + $0x90] sm:$0xff]
        %v363 = vld [vmem:[%s316 + $0x98] sm:$0xff]
        %v364 = vld [vmem:[%s316 + $0xa0] sm:$0xff]
        %v365 = vld [vmem:[%s316 + $0xa8] sm:$0xff]
        %v366 = vld [vmem:[%s316 + $0xb0] sm:$0xff]
        %v367 = vld [vmem:[%s316 + $0xb8] sm:$0xff]
        %v368 = vld [vmem:[%s316 + $0xc0] sm:$0xff]
        %v369 = vld [vmem:[%s316 + $0xc8] sm:$0xff]
        %v370 = vld [vmem:[%s316 + $0xd0] sm:$0xff]
        %v371 = vld [vmem:[%s316 + $0xd8] sm:$0xff]
        %v372 = vld [vmem:[%s316 + $0xe0] sm:$0xff]
        %v373 = vld [vmem:[%s316 + $0xe8] sm:$0xff]
        %v374 = vld [vmem:[%s316 + $0xf0] sm:$0xff]
        %v375 = vld [vmem:[%s316 + $0xf8] sm:$0xff]
        %v376 = vld [vmem:[%s316 + $0x100] sm:$0xff]
        %v377 = vld [vmem:[%s316 + $0x108] sm:$0xff]
        %v378 = vld [vmem:[%s316 + $0x110] sm:$0xff]
        %v379 = vld [vmem:[%s316 + $0x118] sm:$0xff]
        %v380 = vld [vmem:[%s316 + $0x120] sm:$0xff]
        %v381 = vld [vmem:[%s316 + $0x128] sm:$0xff]
        %v382 = vld [vmem:[%s316 + $0x130] sm:$0xff]
        %v383 = vld [vmem:[%s316 + $0x138] sm:$0xff]
        %v384 = vld [vmem:[%s316 + $0x140] sm:$0xff]
        %v385 = vld [vmem:[%s316 + $0x148] sm:$0xff]
        %v386 = vld [vmem:[%s316 + $0x150] sm:$0xff]
        %v387 = vld [vmem:[%s316 + $0x158] sm:$0xff]
        %v388 = vld [vmem:[%s316 + $0x160] sm:$0xff]
        %v389 = vld [vmem:[%s316 + $0x168] sm:$0xff]
        %v390 = vld [vmem:[%s316 + $0x170] sm:$0xff]
        %v391 = vld [vmem:[%s316 + $0x178] sm:$0xff]
        %v392 = vld [vmem:[%s316 + $0x180] sm:$0xff]
        %v393 = vld [vmem:[%s316 + $0x188] sm:$0xff]
        %v394 = vld [vmem:[%s316 + $0x190] sm:$0xff]
        %v395 = vld [vmem:[%s316 + $0x198] sm:$0xff]
        %v396 = vld [vmem:[%s316 + $0x1a0] sm:$0xff]
        %v397 = vld [vmem:[%s316 + $0x1a8] sm:$0xff]
        %v398 = vld [vmem:[%s316 + $0x1b0] sm:$0xff]
        %v399 = vld [vmem:[%s316 + $0x1b8] sm:$0xff]
        %v400 = vld [vmem:[%s316 + $0x1c0] sm:$0xff]
        %v401 = vld [vmem:[%s316 + $0x1c8] sm:$0xff]
        %v402 = vld [vmem:[%s316 + $0x1d0] sm:$0xff]
        %v403 = vld [vmem:[%s316 + $0x1d8] sm:$0xff]
        %v404 = vld [vmem:[%s316 + $0x1e0] sm:$0xff]
        %v405 = vld [vmem:[%s316 + $0x1e8] sm:$0xff]
        %v406 = vld [vmem:[%s316 + $0x1f0] sm:$0xff]
        %v407 = vld [vmem:[%s316 + $0x1f8] sm:$0xff]
        %v408 = vld [vmem:[%s325] sm:$0xff]
        %v409 = vld [vmem:[%s325 + $0x8] sm:$0xff]
        %v410 = vld [vmem:[%s325 + $0x10] sm:$0xff]
        %v411 = vld [vmem:[%s325 + $0x18] sm:$0xff]
        %v412 = vld [vmem:[%s325 + $0x20] sm:$0xff]
        %v413 = vld [vmem:[%s325 + $0x28] sm:$0xff]
        %v414 = vld [vmem:[%s325 + $0x30] sm:$0xff]
        %v415 = vld [vmem:[%s325 + $0x38] sm:$0xff]
        %v416 = vld [vmem:[%s331] sm:$0xff]
        %v417 = vld [vmem:[%s331 + $0x8] sm:$0xff]
        %v418 = vld [vmem:[%s331 + $0x10] sm:$0xff]
        %v419 = vld [vmem:[%s331 + $0x18] sm:$0xff]
        %v420 = vld [vmem:[%s331 + $0x20] sm:$0xff]
        %v421 = vld [vmem:[%s331 + $0x28] sm:$0xff]
        %v422 = vld [vmem:[%s331 + $0x30] sm:$0xff]
        %v423 = vld [vmem:[%s331 + $0x38] sm:$0xff]
        %v424 = vld [vmem:[%s331 + $0x40] sm:$0xff]
        %v425 = vld [vmem:[%s331 + $0x48] sm:$0xff]
        %v426 = vld [vmem:[%s331 + $0x50] sm:$0xff]
        %v427 = vld [vmem:[%s331 + $0x58] sm:$0xff]
        %v428 = vld [vmem:[%s331 + $0x60] sm:$0xff]
        %v429 = vld [vmem:[%s331 + $0x68] sm:$0xff]
        %v430 = vld [vmem:[%s331 + $0x70] sm:$0xff]
        %v431 = vld [vmem:[%s331 + $0x78] sm:$0xff]
        %vm432 = vcmask 261120
        %v434 = vsel %vm432, %v344, 0
        %v437 = vsel %vm432, %v345, 0
        %v440 = vsel %vm432, %v346, 0
        %v443 = vsel %vm432, %v347, 0
        %v446 = vsel %vm432, %v348, 0
        %v449 = vsel %vm432, %v349, 0
        %v452 = vsel %vm432, %v350, 0
        %v455 = vsel %vm432, %v351, 0
        %v458 = vsel %vm432, %v352, 0
        %v461 = vsel %vm432, %v353, 0
        %v464 = vsel %vm432, %v354, 0
        %v467 = vsel %vm432, %v355, 0
        %v470 = vsel %vm432, %v356, 0
        %v473 = vsel %vm432, %v357, 0
        %v476 = vsel %vm432, %v358, 0
        %v479 = vsel %vm432, %v359, 0
        %v482 = vsel %vm432, %v360, 0
        %v485 = vsel %vm432, %v361, 0
        %v488 = vsel %vm432, %v362, 0
        %v491 = vsel %vm432, %v363, 0
        %v494 = vsel %vm432, %v364, 0
        %v497 = vsel %vm432, %v365, 0
        %v500 = vsel %vm432, %v366, 0
        %v503 = vsel %vm432, %v367, 0
        %v506 = vsel %vm432, %v368, 0
        %v509 = vsel %vm432, %v369, 0
        %v512 = vsel %vm432, %v370, 0
        %v515 = vsel %vm432, %v371, 0
        %v518 = vsel %vm432, %v372, 0
        %v521 = vsel %vm432, %v373, 0
        %v524 = vsel %vm432, %v374, 0
        %v527 = vsel %vm432, %v375, 0
        %v530 = vsel %vm432, %v376, 0
        %v533 = vsel %vm432, %v377, 0
        %v536 = vsel %vm432, %v378, 0
        %v539 = vsel %vm432, %v379, 0
        %v542 = vsel %vm432, %v380, 0
        %v545 = vsel %vm432, %v381, 0
        %v548 = vsel %vm432, %v382, 0
        %v551 = vsel %vm432, %v383, 0
        %v554 = vsel %vm432, %v384, 0
        %v557 = vsel %vm432, %v385, 0
        %v560 = vsel %vm432, %v386, 0
        %v563 = vsel %vm432, %v387, 0
        %v566 = vsel %vm432, %v388, 0
        %v569 = vsel %vm432, %v389, 0
        %v572 = vsel %vm432, %v390, 0
        %v575 = vsel %vm432, %v391, 0
        %v578 = vsel %vm432, %v392, 0
        %v581 = vsel %vm432, %v393, 0
        %v584 = vsel %vm432, %v394, 0
        %v587 = vsel %vm432, %v395, 0
        %v590 = vsel %vm432, %v396, 0
        %v593 = vsel %vm432, %v397, 0
        %v596 = vsel %vm432, %v398, 0
        %v599 = vsel %vm432, %v399, 0
        %v602 = vsel %vm432, %v400, 0
        %v605 = vsel %vm432, %v401, 0
        %v608 = vsel %vm432, %v402, 0
        %v611 = vsel %vm432, %v403, 0
        %v614 = vsel %vm432, %v404, 0
        %v617 = vsel %vm432, %v405, 0
        %v620 = vsel %vm432, %v406, 0
        %v623 = vsel %vm432, %v407, 0
        %625 = vmatprep.subr.mxu0 %v409
        %626 = vmatpush1.msra.mxu0 %v408
        %627 = vmatprep.subr.mxu0 %v411
        %628 = vmatpush1.msra.mxu0 %v410
        %629 = vmatprep.subr.mxu0 %v413
        %630 = vmatpush1.msra.mxu0 %v412
        %631 = vmatprep.subr.mxu0 %v415
        %632 = vmatpush1.msra.mxu0 %v414
        %633 = vmatprep.subr.mxu0 0.0
        %634 = vmatpush1.msra.mxu0 0.0
        %635 = vmatprep.subr.mxu0 0.0
        %636 = vmatpush1.msra.mxu0 0.0
        %637 = vmatprep.subr.mxu0 0.0
        %638 = vmatpush1.msra.mxu0 0.0
        %639 = vmatprep.subr.mxu0 0.0
        %640 = vmatpush1.msra.mxu0 0.0
        %641 = vmatprep.subr.mxu0 0.0
        %642 = vmatpush1.msra.mxu0 0.0
        %643 = vmatprep.subr.mxu0 0.0
        %644 = vmatpush1.msra.mxu0 0.0
        %645 = vmatprep.subr.mxu0 0.0
        %646 = vmatpush1.msra.mxu0 0.0
        %647 = vmatprep.subr.mxu0 0.0
        %648 = vmatpush1.msra.mxu0 0.0
        %649 = vmatprep.subr.mxu0 0.0
        %650 = vmatpush1.msra.mxu0 0.0
        %651 = vmatprep.subr.mxu0 0.0
        %652 = vmatpush1.msra.mxu0 0.0
        %653 = vmatprep.subr.mxu0 0.0
        %654 = vmatpush1.msra.mxu0 0.0
        %655 = vmatprep.subr.mxu0 0.0
        %656 = vmatpush1.msra.mxu0 0.0
        %657 = vmatprep.subr.mxu0 0.0
        %658 = vmatpush1.msra.mxu0 0.0
        %659 = vmatprep.subr.mxu0 0.0
        %660 = vmatpush1.msra.mxu0 0.0
        %661 = vmatprep.subr.mxu0 0.0
        %662 = vmatpush1.msra.mxu0 0.0
        %663 = vmatprep.subr.mxu0 0.0
        %664 = vmatpush1.msra.mxu0 0.0
        %665 = vmatprep.subr.mxu0 0.0
        %666 = vmatpush1.msra.mxu0 0.0
        %667 = vmatprep.subr.mxu0 0.0
        %668 = vmatpush1.msra.mxu0 0.0
        %669 = vmatprep.subr.mxu0 0.0
        %670 = vmatpush1.msra.mxu0 0.0
        %671 = vmatprep.subr.mxu0 0.0
        %672 = vmatpush1.msra.mxu0 0.0
        %673 = vmatprep.subr.mxu0 0.0
        %674 = vmatpush1.msra.mxu0 0.0
        %675 = vmatprep.subr.mxu0 0.0
        %676 = vmatpush1.msra.mxu0 0.0
        %677 = vmatprep.subr.mxu0 0.0
        %678 = vmatpush1.msra.mxu0 0.0
        %679 = vmatprep.subr.mxu0 0.0
        %680 = vmatpush1.msra.mxu0 0.0
        %681 = vmatprep.subr.mxu0 0.0
        %682 = vmatpush1.msra.mxu0 0.0
        %683 = vmatprep.subr.mxu0 0.0
        %684 = vmatpush1.msra.mxu0 0.0
        %685 = vmatprep.subr.mxu0 0.0
        %686 = vmatpush1.msra.mxu0 0.0
        %687 = vmatprep.subr.mxu0 0.0
        %688 = vmatpush1.msra.mxu0 0.0
        %689 = vmatprep.mubr.f32.mxu0 0.0
        %690 = vmatmul.mubr.f32.gmra.mrb[0].mxu0 %v434
        %v691 = vpop.f32.mrb[0].mxu0
        %v692 = vadd.f32 0.0, %v691
        %v693 = vpop.f32.mrb[0].mxu0
        %v694 = vadd.f32 0.0, %v693
        %695 = vmatprep.mubr.f32.mxu0 0.0
        %696 = vmatmul.mubr.f32.gmra.mrb[0].mxu0 %v437
        %v697 = vpop.f32.mrb[0].mxu0
        %v698 = vadd.f32 0.0, %v697
        %v699 = vpop.f32.mrb[0].mxu0
        %v700 = vadd.f32 0.0, %v699
        %701 = vmatprep.mubr.f32.mxu0 0.0
        %702 = vmatmul.mubr.f32.gmra.mrb[0].mxu0 %v440
        %v703 = vpop.f32.mrb[0].mxu0
        %v704 = vadd.f32 0.0, %v703
        %v705 = vpop.f32.mrb[0].mxu0
        %v706 = vadd.f32 0.0, %v705
        %707 = vmatprep.mubr.f32.mxu0 0.0
        %708 = vmatmul.mubr.f32.gmra.mrb[0].mxu0 %v443
        %v709 = vpop.f32.mrb[0].mxu0
        %v710 = vadd.f32 0.0, %v709
        %v711 = vpop.f32.mrb[0].mxu0
        %v712 = vadd.f32 0.0, %v711
        %713 = vmatprep.mubr.f32.mxu0 0.0
        %714 = vmatmul.mubr.f32.gmra.mrb[0].mxu0 %v446
        %v715 = vpop.f32.mrb[0].mxu0
        %v716 = vadd.f32 0.0, %v715
        %v717 = vpop.f32.mrb[0].mxu0
        %v718 = vadd.f32 0.0, %v717
        %719 = vmatprep.mubr.f32.mxu0 0.0
        %720 = vmatmul.mubr.f32.gmra.mrb[0].mxu0 %v449
        %v721 = vpop.f32.mrb[0].mxu0
        %v722 = vadd.f32 0.0, %v721
        %v723 = vpop.f32.mrb[0].mxu0
        %v724 = vadd.f32 0.0, %v723
        %725 = vmatprep.mubr.f32.mxu0 0.0
        %726 = vmatmul.mubr.f32.gmra.mrb[0].mxu0 %v452
        %v727 = vpop.f32.mrb[0].mxu0
        %v728 = vadd.f32 0.0, %v727
        %v729 = vpop.f32.mrb[0].mxu0
        %v730 = vadd.f32 0.0, %v729
        %731 = vmatprep.mubr.f32.mxu0 0.0
        %732 = vmatmul.mubr.f32.gmra.mrb[0].mxu0 %v455
        %v733 = vpop.f32.mrb[0].mxu0
        %v734 = vadd.f32 0.0, %v733
        %v735 = vpop.f32.mrb[0].mxu0
        %v736 = vadd.f32 0.0, %v735
        %737 = vmatprep.mubr.f32.mxu0 0.0
        %738 = vmatmul.mubr.f32.gmra.mrb[0].mxu0 %v458
        %v739 = vpop.f32.mrb[0].mxu0
        %v740 = vadd.f32 0.0, %v739
        %v741 = vpop.f32.mrb[0].mxu0
        %v742 = vadd.f32 0.0, %v741
        %743 = vmatprep.mubr.f32.mxu0 0.0
        %744 = vmatmul.mubr.f32.gmra.mrb[0].mxu0 %v461
        %v745 = vpop.f32.mrb[0].mxu0
        %v746 = vadd.f32 0.0, %v745
        %v747 = vpop.f32.mrb[0].mxu0
        %v748 = vadd.f32 0.0, %v747
        %749 = vmatprep.mubr.f32.mxu0 0.0
        %750 = vmatmul.mubr.f32.gmra.mrb[0].mxu0 %v464
        %v751 = vpop.f32.mrb[0].mxu0
        %v752 = vadd.f32 0.0, %v751
        %v753 = vpop.f32.mrb[0].mxu0
        %v754 = vadd.f32 0.0, %v753
        %755 = vmatprep.mubr.f32.mxu0 0.0
        %756 = vmatmul.mubr.f32.gmra.mrb[0].mxu0 %v467
        %v757 = vpop.f32.mrb[0].mxu0
        %v758 = vadd.f32 0.0, %v757
        %v759 = vpop.f32.mrb[0].mxu0
        %v760 = vadd.f32 0.0, %v759
        %761 = vmatprep.mubr.f32.mxu0 0.0
        %762 = vmatmul.mubr.f32.gmra.mrb[0].mxu0 %v470
        %v763 = vpop.f32.mrb[0].mxu0
        %v764 = vadd.f32 0.0, %v763
        %v765 = vpop.f32.mrb[0].mxu0
        %v766 = vadd.f32 0.0, %v765
        %767 = vmatprep.mubr.f32.mxu0 0.0
        %768 = vmatmul.mubr.f32.gmra.mrb[0].mxu0 %v473
        %v769 = vpop.f32.mrb[0].mxu0
        %v770 = vadd.f32 0.0, %v769
        %v771 = vpop.f32.mrb[0].mxu0
        %v772 = vadd.f32 0.0, %v771
        %773 = vmatprep.mubr.f32.mxu0 0.0
        %774 = vmatmul.mubr.f32.gmra.mrb[0].mxu0 %v476
        %v775 = vpop.f32.mrb[0].mxu0
        %v776 = vadd.f32 0.0, %v775
        %v777 = vpop.f32.mrb[0].mxu0
        %v778 = vadd.f32 0.0, %v777
        %779 = vmatprep.mubr.f32.mxu0 0.0
        %780 = vmatmul.mubr.f32.gmra.mrb[0].mxu0 %v479
        %v781 = vpop.f32.mrb[0].mxu0
        %v782 = vadd.f32 0.0, %v781
        %v783 = vpop.f32.mrb[0].mxu0
        %v784 = vadd.f32 0.0, %v783
        %785 = vmatprep.mubr.f32.mxu0 0.0
        %786 = vmatmul.mubr.f32.gmra.mrb[0].mxu0 %v482
        %v787 = vpop.f32.mrb[0].mxu0
        %v788 = vadd.f32 0.0, %v787
        %v789 = vpop.f32.mrb[0].mxu0
        %v790 = vadd.f32 0.0, %v789
        %791 = vmatprep.mubr.f32.mxu0 0.0
        %792 = vmatmul.mubr.f32.gmra.mrb[0].mxu0 %v485
        %v793 = vpop.f32.mrb[0].mxu0
        %v794 = vadd.f32 0.0, %v793
        %v795 = vpop.f32.mrb[0].mxu0
        %v796 = vadd.f32 0.0, %v795
        %797 = vmatprep.mubr.f32.mxu0 0.0
        %798 = vmatmul.mubr.f32.gmra.mrb[0].mxu0 %v488
        %v799 = vpop.f32.mrb[0].mxu0
        %v800 = vadd.f32 0.0, %v799
        %v801 = vpop.f32.mrb[0].mxu0
        %v802 = vadd.f32 0.0, %v801
        %803 = vmatprep.mubr.f32.mxu0 0.0
        %804 = vmatmul.mubr.f32.gmra.mrb[0].mxu0 %v491
        %v805 = vpop.f32.mrb[0].mxu0
        %v806 = vadd.f32 0.0, %v805
        %v807 = vpop.f32.mrb[0].mxu0
        %v808 = vadd.f32 0.0, %v807
        %809 = vmatprep.mubr.f32.mxu0 0.0
        %810 = vmatmul.mubr.f32.gmra.mrb[0].mxu0 %v494
        %v811 = vpop.f32.mrb[0].mxu0
        %v812 = vadd.f32 0.0, %v811
        %v813 = vpop.f32.mrb[0].mxu0
        %v814 = vadd.f32 0.0, %v813
        %815 = vmatprep.mubr.f32.mxu0 0.0
        %816 = vmatmul.mubr.f32.gmra.mrb[0].mxu0 %v497
        %v817 = vpop.f32.mrb[0].mxu0
        %v818 = vadd.f32 0.0, %v817
        %v819 = vpop.f32.mrb[0].mxu0
        %v820 = vadd.f32 0.0, %v819
        %821 = vmatprep.mubr.f32.mxu0 0.0
        %822 = vmatmul.mubr.f32.gmra.mrb[0].mxu0 %v500
        %v823 = vpop.f32.mrb[0].mxu0
        %v824 = vadd.f32 0.0, %v823
        %v825 = vpop.f32.mrb[0].mxu0
        %v826 = vadd.f32 0.0, %v825
        %827 = vmatprep.mubr.f32.mxu0 0.0
        %828 = vmatmul.mubr.f32.gmra.mrb[0].mxu0 %v503
        %v829 = vpop.f32.mrb[0].mxu0
        %v830 = vadd.f32 0.0, %v829
        %v831 = vpop.f32.mrb[0].mxu0
        %v832 = vadd.f32 0.0, %v831
        %833 = vmatprep.mubr.f32.mxu0 0.0
        %834 = vmatmul.mubr.f32.gmra.mrb[0].mxu0 %v506
        %v835 = vpop.f32.mrb[0].mxu0
        %v836 = vadd.f32 0.0, %v835
        %v837 = vpop.f32.mrb[0].mxu0
        %v838 = vadd.f32 0.0, %v837
        %839 = vmatprep.mubr.f32.mxu0 0.0
        %840 = vmatmul.mubr.f32.gmra.mrb[0].mxu0 %v509
        %v841 = vpop.f32.mrb[0].mxu0
        %v842 = vadd.f32 0.0, %v841
        %v843 = vpop.f32.mrb[0].mxu0
        %v844 = vadd.f32 0.0, %v843
        %845 = vmatprep.mubr.f32.mxu0 0.0
        %846 = vmatmul.mubr.f32.gmra.mrb[0].mxu0 %v512
        %v847 = vpop.f32.mrb[0].mxu0
        %v848 = vadd.f32 0.0, %v847
        %v849 = vpop.f32.mrb[0].mxu0
        %v850 = vadd.f32 0.0, %v849
        %851 = vmatprep.mubr.f32.mxu0 0.0
        %852 = vmatmul.mubr.f32.gmra.mrb[0].mxu0 %v515
        %v853 = vpop.f32.mrb[0].mxu0
        %v854 = vadd.f32 0.0, %v853
        %v855 = vpop.f32.mrb[0].mxu0
        %v856 = vadd.f32 0.0, %v855
        %857 = vmatprep.mubr.f32.mxu0 0.0
        %858 = vmatmul.mubr.f32.gmra.mrb[0].mxu0 %v518
        %v859 = vpop.f32.mrb[0].mxu0
        %v860 = vadd.f32 0.0, %v859
        %v861 = vpop.f32.mrb[0].mxu0
        %v862 = vadd.f32 0.0, %v861
        %863 = vmatprep.mubr.f32.mxu0 0.0
        %864 = vmatmul.mubr.f32.gmra.mrb[0].mxu0 %v521
        %v865 = vpop.f32.mrb[0].mxu0
        %v866 = vadd.f32 0.0, %v865
        %v867 = vpop.f32.mrb[0].mxu0
        %v868 = vadd.f32 0.0, %v867
        %869 = vmatprep.mubr.f32.mxu0 0.0
        %870 = vmatmul.mubr.f32.gmra.mrb[0].mxu0 %v524
        %v871 = vpop.f32.mrb[0].mxu0
        %v872 = vadd.f32 0.0, %v871
        %v873 = vpop.f32.mrb[0].mxu0
        %v874 = vadd.f32 0.0, %v873
        %875 = vmatprep.mubr.f32.mxu0 0.0
        %876 = vmatmul.mubr.f32.gmra.mrb[0].mxu0 %v527
        %v877 = vpop.f32.mrb[0].mxu0
        %v878 = vadd.f32 0.0, %v877
        %v879 = vpop.f32.mrb[0].mxu0
        %v880 = vadd.f32 0.0, %v879
        %881 = vmatprep.mubr.f32.mxu0 0.0
        %882 = vmatmul.mubr.f32.gmra.mrb[0].mxu0 %v530
        %v883 = vpop.f32.mrb[0].mxu0
        %v884 = vadd.f32 0.0, %v883
        %v885 = vpop.f32.mrb[0].mxu0
        %v886 = vadd.f32 0.0, %v885
        %887 = vmatprep.mubr.f32.mxu0 0.0
        %888 = vmatmul.mubr.f32.gmra.mrb[0].mxu0 %v533
        %v889 = vpop.f32.mrb[0].mxu0
        %v890 = vadd.f32 0.0, %v889
        %v891 = vpop.f32.mrb[0].mxu0
        %v892 = vadd.f32 0.0, %v891
        %893 = vmatprep.mubr.f32.mxu0 0.0
        %894 = vmatmul.mubr.f32.gmra.mrb[0].mxu0 %v536
        %v895 = vpop.f32.mrb[0].mxu0
        %v896 = vadd.f32 0.0, %v895
        %v897 = vpop.f32.mrb[0].mxu0
        %v898 = vadd.f32 0.0, %v897
        %899 = vmatprep.mubr.f32.mxu0 0.0
        %900 = vmatmul.mubr.f32.gmra.mrb[0].mxu0 %v539
        %v901 = vpop.f32.mrb[0].mxu0
        %v902 = vadd.f32 0.0, %v901
        %v903 = vpop.f32.mrb[0].mxu0
        %v904 = vadd.f32 0.0, %v903
        %905 = vmatprep.mubr.f32.mxu0 0.0
        %906 = vmatmul.mubr.f32.gmra.mrb[0].mxu0 %v542
        %v907 = vpop.f32.mrb[0].mxu0
        %v908 = vadd.f32 0.0, %v907
        %v909 = vpop.f32.mrb[0].mxu0
        %v910 = vadd.f32 0.0, %v909
        %911 = vmatprep.mubr.f32.mxu0 0.0
        %912 = vmatmul.mubr.f32.gmra.mrb[0].mxu0 %v545
        %v913 = vpop.f32.mrb[0].mxu0
        %v914 = vadd.f32 0.0, %v913
        %v915 = vpop.f32.mrb[0].mxu0
        %v916 = vadd.f32 0.0, %v915
        %917 = vmatprep.mubr.f32.mxu0 0.0
        %918 = vmatmul.mubr.f32.gmra.mrb[0].mxu0 %v548
        %v919 = vpop.f32.mrb[0].mxu0
        %v920 = vadd.f32 0.0, %v919
        %v921 = vpop.f32.mrb[0].mxu0
        %v922 = vadd.f32 0.0, %v921
        %923 = vmatprep.mubr.f32.mxu0 0.0
        %924 = vmatmul.mubr.f32.gmra.mrb[0].mxu0 %v551
        %v925 = vpop.f32.mrb[0].mxu0
        %v926 = vadd.f32 0.0, %v925
        %v927 = vpop.f32.mrb[0].mxu0
        %v928 = vadd.f32 0.0, %v927
        %929 = vmatprep.mubr.f32.mxu0 0.0
        %930 = vmatmul.mubr.f32.gmra.mrb[0].mxu0 %v554
        %v931 = vpop.f32.mrb[0].mxu0
        %v932 = vadd.f32 0.0, %v931
        %v933 = vpop.f32.mrb[0].mxu0
        %v934 = vadd.f32 0.0, %v933
        %935 = vmatprep.mubr.f32.mxu0 0.0
        %936 = vmatmul.mubr.f32.gmra.mrb[0].mxu0 %v557
        %v937 = vpop.f32.mrb[0].mxu0
        %v938 = vadd.f32 0.0, %v937
        %v939 = vpop.f32.mrb[0].mxu0
        %v940 = vadd.f32 0.0, %v939
        %941 = vmatprep.mubr.f32.mxu0 0.0
        %942 = vmatmul.mubr.f32.gmra.mrb[0].mxu0 %v560
        %v943 = vpop.f32.mrb[0].mxu0
        %v944 = vadd.f32 0.0, %v943
        %v945 = vpop.f32.mrb[0].mxu0
        %v946 = vadd.f32 0.0, %v945
        %947 = vmatprep.mubr.f32.mxu0 0.0
        %948 = vmatmul.mubr.f32.gmra.mrb[0].mxu0 %v563
        %v949 = vpop.f32.mrb[0].mxu0
        %v950 = vadd.f32 0.0, %v949
        %v951 = vpop.f32.mrb[0].mxu0
        %v952 = vadd.f32 0.0, %v951
        %953 = vmatprep.mubr.f32.mxu0 0.0
        %954 = vmatmul.mubr.f32.gmra.mrb[0].mxu0 %v566
        %v955 = vpop.f32.mrb[0].mxu0
        %v956 = vadd.f32 0.0, %v955
        %v957 = vpop.f32.mrb[0].mxu0
        %v958 = vadd.f32 0.0, %v957
        %959 = vmatprep.mubr.f32.mxu0 0.0
        %960 = vmatmul.mubr.f32.gmra.mrb[0].mxu0 %v569
        %v961 = vpop.f32.mrb[0].mxu0
        %v962 = vadd.f32 0.0, %v961
        %v963 = vpop.f32.mrb[0].mxu0
        %v964 = vadd.f32 0.0, %v963
        %965 = vmatprep.mubr.f32.mxu0 0.0
        %966 = vmatmul.mubr.f32.gmra.mrb[0].mxu0 %v572
        %v967 = vpop.f32.mrb[0].mxu0
        %v968 = vadd.f32 0.0, %v967
        %v969 = vpop.f32.mrb[0].mxu0
        %v970 = vadd.f32 0.0, %v969
        %971 = vmatprep.mubr.f32.mxu0 0.0
        %972 = vmatmul.mubr.f32.gmra.mrb[0].mxu0 %v575
        %v973 = vpop.f32.mrb[0].mxu0
        %v974 = vadd.f32 0.0, %v973
        %v975 = vpop.f32.mrb[0].mxu0
        %v976 = vadd.f32 0.0, %v975
        %977 = vmatprep.mubr.f32.mxu0 0.0
        %978 = vmatmul.mubr.f32.gmra.mrb[0].mxu0 %v578
        %v979 = vpop.f32.mrb[0].mxu0
        %v980 = vadd.f32 0.0, %v979
        %v981 = vpop.f32.mrb[0].mxu0
        %v982 = vadd.f32 0.0, %v981
        %983 = vmatprep.mubr.f32.mxu0 0.0
        %984 = vmatmul.mubr.f32.gmra.mrb[0].mxu0 %v581
        %v985 = vpop.f32.mrb[0].mxu0
        %v986 = vadd.f32 0.0, %v985
        %v987 = vpop.f32.mrb[0].mxu0
        %v988 = vadd.f32 0.0, %v987
        %989 = vmatprep.mubr.f32.mxu0 0.0
        %990 = vmatmul.mubr.f32.gmra.mrb[0].mxu0 %v584
        %v991 = vpop.f32.mrb[0].mxu0
        %v992 = vadd.f32 0.0, %v991
        %v993 = vpop.f32.mrb[0].mxu0
        %v994 = vadd.f32 0.0, %v993
        %995 = vmatprep.mubr.f32.mxu0 0.0
        %996 = vmatmul.mubr.f32.gmra.mrb[0].mxu0 %v587
        %v997 = vpop.f32.mrb[0].mxu0
        %v998 = vadd.f32 0.0, %v997
        %v999 = vpop.f32.mrb[0].mxu0
        %v1000 = vadd.f32 0.0, %v999
        %1001 = vmatprep.mubr.f32.mxu0 0.0
        %1002 = vmatmul.mubr.f32.gmra.mrb[0].mxu0 %v590
        %v1003 = vpop.f32.mrb[0].mxu0
        %v1004 = vadd.f32 0.0, %v1003
        %v1005 = vpop.f32.mrb[0].mxu0
        %v1006 = vadd.f32 0.0, %v1005
        %1007 = vmatprep.mubr.f32.mxu0 0.0
        %1008 = vmatmul.mubr.f32.gmra.mrb[0].mxu0 %v593
        %v1009 = vpop.f32.mrb[0].mxu0
        %v1010 = vadd.f32 0.0, %v1009
        %v1011 = vpop.f32.mrb[0].mxu0
        %v1012 = vadd.f32 0.0, %v1011
        %1013 = vmatprep.mubr.f32.mxu0 0.0
        %1014 = vmatmul.mubr.f32.gmra.mrb[0].mxu0 %v596
        %v1015 = vpop.f32.mrb[0].mxu0
        %v1016 = vadd.f32 0.0, %v1015
        %v1017 = vpop.f32.mrb[0].mxu0
        %v1018 = vadd.f32 0.0, %v1017
        %1019 = vmatprep.mubr.f32.mxu0 0.0
        %1020 = vmatmul.mubr.f32.gmra.mrb[0].mxu0 %v599
        %v1021 = vpop.f32.mrb[0].mxu0
        %v1022 = vadd.f32 0.0, %v1021
        %v1023 = vpop.f32.mrb[0].mxu0
        %v1024 = vadd.f32 0.0, %v1023
        %1025 = vmatprep.mubr.f32.mxu0 0.0
        %1026 = vmatmul.mubr.f32.gmra.mrb[0].mxu0 %v602
        %v1027 = vpop.f32.mrb[0].mxu0
        %v1028 = vadd.f32 0.0, %v1027
        %v1029 = vpop.f32.mrb[0].mxu0
        %v1030 = vadd.f32 0.0, %v1029
        %1031 = vmatprep.mubr.f32.mxu0 0.0
        %1032 = vmatmul.mubr.f32.gmra.mrb[0].mxu0 %v605
        %v1033 = vpop.f32.mrb[0].mxu0
        %v1034 = vadd.f32 0.0, %v1033
        %v1035 = vpop.f32.mrb[0].mxu0
        %v1036 = vadd.f32 0.0, %v1035
        %1037 = vmatprep.mubr.f32.mxu0 0.0
        %1038 = vmatmul.mubr.f32.gmra.mrb[0].mxu0 %v608
        %v1039 = vpop.f32.mrb[0].mxu0
        %v1040 = vadd.f32 0.0, %v1039
        %v1041 = vpop.f32.mrb[0].mxu0
        %v1042 = vadd.f32 0.0, %v1041
        %1043 = vmatprep.mubr.f32.mxu0 0.0
        %1044 = vmatmul.mubr.f32.gmra.mrb[0].mxu0 %v611
        %v1045 = vpop.f32.mrb[0].mxu0
        %v1046 = vadd.f32 0.0, %v1045
        %v1047 = vpop.f32.mrb[0].mxu0
        %v1048 = vadd.f32 0.0, %v1047
        %1049 = vmatprep.mubr.f32.mxu0 0.0
        %1050 = vmatmul.mubr.f32.gmra.mrb[0].mxu0 %v614
        %v1051 = vpop.f32.mrb[0].mxu0
        %v1052 = vadd.f32 0.0, %v1051
        %v1053 = vpop.f32.mrb[0].mxu0
        %v1054 = vadd.f32 0.0, %v1053
        %1055 = vmatprep.mubr.f32.mxu0 0.0
        %1056 = vmatmul.mubr.f32.gmra.mrb[0].mxu0 %v617
        %v1057 = vpop.f32.mrb[0].mxu0
        %v1058 = vadd.f32 0.0, %v1057
        %v1059 = vpop.f32.mrb[0].mxu0
        %v1060 = vadd.f32 0.0, %v1059
        %1061 = vmatprep.mubr.f32.mxu0 0.0
        %1062 = vmatmul.mubr.f32.gmra.mrb[0].mxu0 %v620
        %v1063 = vpop.f32.mrb[0].mxu0
        %v1064 = vadd.f32 0.0, %v1063
        %v1065 = vpop.f32.mrb[0].mxu0
        %v1066 = vadd.f32 0.0, %v1065
        %1067 = vmatprep.mubr.f32.mxu0 0.0
        %1068 = vmatmul.mubr.f32.gmra.mrb[0].mxu0 %v623
        %v1069 = vpop.f32.mrb[0].mxu0
        %v1070 = vadd.f32 0.0, %v1069
        %v1071 = vpop.f32.mrb[0].mxu0
        %v1072 = vadd.f32 0.0, %v1071
        %1073 = vdwg.mxu0
        %v1074 = vmul.f32 %v692, 0.17677669
        %v1075 = vmul.f32 %v694, 0.17677669
        %v1076 = vmul.f32 %v698, 0.17677669
        %v1077 = vmul.f32 %v700, 0.17677669
        %v1078 = vmul.f32 %v704, 0.17677669
        %v1079 = vmul.f32 %v706, 0.17677669
        %v1080 = vmul.f32 %v710, 0.17677669
        %v1081 = vmul.f32 %v712, 0.17677669
        %v1082 = vmul.f32 %v716, 0.17677669
        %v1083 = vmul.f32 %v718, 0.17677669
        %v1084 = vmul.f32 %v722, 0.17677669
        %v1085 = vmul.f32 %v724, 0.17677669
        %v1086 = vmul.f32 %v728, 0.17677669
        %v1087 = vmul.f32 %v730, 0.17677669
        %v1088 = vmul.f32 %v734, 0.17677669
        %v1089 = vmul.f32 %v736, 0.17677669
        %v1090 = vmul.f32 %v740, 0.17677669
        %v1091 = vmul.f32 %v742, 0.17677669
        %v1092 = vmul.f32 %v746, 0.17677669
        %v1093 = vmul.f32 %v748, 0.17677669
        %v1094 = vmul.f32 %v752, 0.17677669
        %v1095 = vmul.f32 %v754, 0.17677669
        %v1096 = vmul.f32 %v758, 0.17677669
        %v1097 = vmul.f32 %v760, 0.17677669
        %v1098 = vmul.f32 %v764, 0.17677669
        %v1099 = vmul.f32 %v766, 0.17677669
        %v1100 = vmul.f32 %v770, 0.17677669
        %v1101 = vmul.f32 %v772, 0.17677669
        %v1102 = vmul.f32 %v776, 0.17677669
        %v1103 = vmul.f32 %v778, 0.17677669
        %v1104 = vmul.f32 %v782, 0.17677669
        %v1105 = vmul.f32 %v784, 0.17677669
        %v1106 = vmul.f32 %v788, 0.17677669
        %v1107 = vmul.f32 %v790, 0.17677669
        %v1108 = vmul.f32 %v794, 0.17677669
        %v1109 = vmul.f32 %v796, 0.17677669
        %v1110 = vmul.f32 %v800, 0.17677669
        %v1111 = vmul.f32 %v802, 0.17677669
        %v1112 = vmul.f32 %v806, 0.17677669
        %v1113 = vmul.f32 %v808, 0.17677669
        %v1114 = vmul.f32 %v812, 0.17677669
        %v1115 = vmul.f32 %v814, 0.17677669
        %v1116 = vmul.f32 %v818, 0.17677669
        %v1117 = vmul.f32 %v820, 0.17677669
        %v1118 = vmul.f32 %v824, 0.17677669
        %v1119 = vmul.f32 %v826, 0.17677669
        %v1120 = vmul.f32 %v830, 0.17677669
        %v1121 = vmul.f32 %v832, 0.17677669
        %v1122 = vmul.f32 %v836, 0.17677669
        %v1123 = vmul.f32 %v838, 0.17677669
        %v1124 = vmul.f32 %v842, 0.17677669
        %v1125 = vmul.f32 %v844, 0.17677669
        %v1126 = vmul.f32 %v848, 0.17677669
        %v1127 = vmul.f32 %v850, 0.17677669
        %v1128 = vmul.f32 %v854, 0.17677669
        %v1129 = vmul.f32 %v856, 0.17677669
        %v1130 = vmul.f32 %v860, 0.17677669
        %v1131 = vmul.f32 %v862, 0.17677669
        %v1132 = vmul.f32 %v866, 0.17677669
        %v1133 = vmul.f32 %v868, 0.17677669
        %v1134 = vmul.f32 %v872, 0.17677669
        %v1135 = vmul.f32 %v874, 0.17677669
        %v1136 = vmul.f32 %v878, 0.17677669
        %v1137 = vmul.f32 %v880, 0.17677669
        %v1138 = vmul.f32 %v884, 0.17677669
        %v1139 = vmul.f32 %v886, 0.17677669
        %v1140 = vmul.f32 %v890, 0.17677669
        %v1141 = vmul.f32 %v892, 0.17677669
        %v1142 = vmul.f32 %v896, 0.17677669
        %v1143 = vmul.f32 %v898, 0.17677669
        %v1144 = vmul.f32 %v902, 0.17677669
        %v1145 = vmul.f32 %v904, 0.17677669
        %v1146 = vmul.f32 %v908, 0.17677669
        %v1147 = vmul.f32 %v910, 0.17677669
        %v1148 = vmul.f32 %v914, 0.17677669
        %v1149 = vmul.f32 %v916, 0.17677669
        %v1150 = vmul.f32 %v920, 0.17677669
        %v1151 = vmul.f32 %v922, 0.17677669
        %v1152 = vmul.f32 %v926, 0.17677669
        %v1153 = vmul.f32 %v928, 0.17677669
        %v1154 = vmul.f32 %v932, 0.17677669
        %v1155 = vmul.f32 %v934, 0.17677669
        %v1156 = vmul.f32 %v938, 0.17677669
        %v1157 = vmul.f32 %v940, 0.17677669
        %v1158 = vmul.f32 %v944, 0.17677669
        %v1159 = vmul.f32 %v946, 0.17677669
        %v1160 = vmul.f32 %v950, 0.17677669
        %v1161 = vmul.f32 %v952, 0.17677669
        %v1162 = vmul.f32 %v956, 0.17677669
        %v1163 = vmul.f32 %v958, 0.17677669
        %v1164 = vmul.f32 %v962, 0.17677669
        %v1165 = vmul.f32 %v964, 0.17677669
        %v1166 = vmul.f32 %v968, 0.17677669
        %v1167 = vmul.f32 %v970, 0.17677669
        %v1168 = vmul.f32 %v974, 0.17677669
        %v1169 = vmul.f32 %v976, 0.17677669
        %v1170 = vmul.f32 %v980, 0.17677669
        %v1171 = vmul.f32 %v982, 0.17677669
        %v1172 = vmul.f32 %v986, 0.17677669
        %v1173 = vmul.f32 %v988, 0.17677669
        %v1174 = vmul.f32 %v992, 0.17677669
        %v1175 = vmul.f32 %v994, 0.17677669
        %v1176 = vmul.f32 %v998, 0.17677669
        %v1177 = vmul.f32 %v1000, 0.17677669
        %v1178 = vmul.f32 %v1004, 0.17677669
        %v1179 = vmul.f32 %v1006, 0.17677669
        %v1180 = vmul.f32 %v1010, 0.17677669
        %v1181 = vmul.f32 %v1012, 0.17677669
        %v1182 = vmul.f32 %v1016, 0.17677669
        %v1183 = vmul.f32 %v1018, 0.17677669
        %v1184 = vmul.f32 %v1022, 0.17677669
        %v1185 = vmul.f32 %v1024, 0.17677669
        %v1186 = vmul.f32 %v1028, 0.17677669
        %v1187 = vmul.f32 %v1030, 0.17677669
        %v1188 = vmul.f32 %v1034, 0.17677669
        %v1189 = vmul.f32 %v1036, 0.17677669
        %v1190 = vmul.f32 %v1040, 0.17677669
        %v1191 = vmul.f32 %v1042, 0.17677669
        %v1192 = vmul.f32 %v1046, 0.17677669
        %v1193 = vmul.f32 %v1048, 0.17677669
        %v1194 = vmul.f32 %v1052, 0.17677669
        %v1195 = vmul.f32 %v1054, 0.17677669
        %v1196 = vmul.f32 %v1058, 0.17677669
        %v1197 = vmul.f32 %v1060, 0.17677669
        %v1198 = vmul.f32 %v1064, 0.17677669
        %v1199 = vmul.f32 %v1066, 0.17677669
        %v1200 = vmul.f32 %v1070, 0.17677669
        %v1201 = vmul.f32 %v1072, 0.17677669
        %v1202 = vmax.f32 %v1074, %v1078
        %v1203 = vmax.f32 %v1076, %v1080
        %v1204 = vmax.f32 %v1202, %v1082
        %v1205 = vmax.f32 %v1203, %v1084
        %v1206 = vmax.f32 %v1204, %v1086
        %v1207 = vmax.f32 %v1205, %v1088
        %v1208 = vmax.f32 %v1206, %v1090
        %v1209 = vmax.f32 %v1207, %v1092
        %v1210 = vmax.f32 %v1208, %v1094
        %v1211 = vmax.f32 %v1209, %v1096
        %v1212 = vmax.f32 %v1210, %v1098
        %v1213 = vmax.f32 %v1211, %v1100
        %v1214 = vmax.f32 %v1212, %v1102
        %v1215 = vmax.f32 %v1213, %v1104
        %v1216 = vmax.f32 %v1214, %v1106
        %v1217 = vmax.f32 %v1215, %v1108
        %v1218 = vmax.f32 %v1216, %v1110
        %v1219 = vmax.f32 %v1217, %v1112
        %v1220 = vmax.f32 %v1218, %v1114
        %v1221 = vmax.f32 %v1219, %v1116
        %v1222 = vmax.f32 %v1220, %v1118
        %v1223 = vmax.f32 %v1221, %v1120
        %v1224 = vmax.f32 %v1222, %v1122
        %v1225 = vmax.f32 %v1223, %v1124
        %v1226 = vmax.f32 %v1224, %v1126
        %v1227 = vmax.f32 %v1225, %v1128
        %v1228 = vmax.f32 %v1226, %v1130
        %v1229 = vmax.f32 %v1227, %v1132
        %v1230 = vmax.f32 %v1228, %v1134
        %v1231 = vmax.f32 %v1229, %v1136
        %v1232 = vmax.f32 %v1230, %v1138
        %v1233 = vmax.f32 %v1231, %v1140
        %v1234 = vmax.f32 %v1232, %v1142
        %v1235 = vmax.f32 %v1233, %v1144
        %v1236 = vmax.f32 %v1234, %v1146
        %v1237 = vmax.f32 %v1235, %v1148
        %v1238 = vmax.f32 %v1236, %v1150
        %v1239 = vmax.f32 %v1237, %v1152
        %v1240 = vmax.f32 %v1238, %v1154
        %v1241 = vmax.f32 %v1239, %v1156
        %v1242 = vmax.f32 %v1240, %v1158
        %v1243 = vmax.f32 %v1241, %v1160
        %v1244 = vmax.f32 %v1242, %v1162
        %v1245 = vmax.f32 %v1243, %v1164
        %v1246 = vmax.f32 %v1244, %v1166
        %v1247 = vmax.f32 %v1245, %v1168
        %v1248 = vmax.f32 %v1246, %v1170
        %v1249 = vmax.f32 %v1247, %v1172
        %v1250 = vmax.f32 %v1248, %v1174
        %v1251 = vmax.f32 %v1249, %v1176
        %v1252 = vmax.f32 %v1250, %v1178
        %v1253 = vmax.f32 %v1251, %v1180
        %v1254 = vmax.f32 %v1252, %v1182
        %v1255 = vmax.f32 %v1253, %v1184
        %v1256 = vmax.f32 %v1254, %v1186
        %v1257 = vmax.f32 %v1255, %v1188
        %v1258 = vmax.f32 %v1256, %v1190
        %v1259 = vmax.f32 %v1257, %v1192
        %v1260 = vmax.f32 %v1258, %v1194
        %v1261 = vmax.f32 %v1259, %v1196
        %v1262 = vmax.f32 %v1260, %v1198
        %v1263 = vmax.f32 %v1261, %v1200
        %v1264 = vmax.f32 %v1262, %v1263
        %v1265 = vrot.slane %v1264, 4
        %v1266 = vmax.f32 %v1264, %v1265
        %v1267 = vrot.slane %v1266, 2
        %v1268 = vmax.f32 %v1266, %v1267
        %v1269 = vrot.slane %v1268, 1
        %v1270 = vmax.f32 %v1268, %v1269
        %v1271 = vmax.f32 %v1075, %v1079
        %v1272 = vmax.f32 %v1077, %v1081
        %v1273 = vmax.f32 %v1271, %v1083
        %v1274 = vmax.f32 %v1272, %v1085
        %v1275 = vmax.f32 %v1273, %v1087
        %v1276 = vmax.f32 %v1274, %v1089
        %v1277 = vmax.f32 %v1275, %v1091
        %v1278 = vmax.f32 %v1276, %v1093
        %v1279 = vmax.f32 %v1277, %v1095
        %v1280 = vmax.f32 %v1278, %v1097
        %v1281 = vmax.f32 %v1279, %v1099
        %v1282 = vmax.f32 %v1280, %v1101
        %v1283 = vmax.f32 %v1281, %v1103
        %v1284 = vmax.f32 %v1282, %v1105
        %v1285 = vmax.f32 %v1283, %v1107
        %v1286 = vmax.f32 %v1284, %v1109
        %v1287 = vmax.f32 %v1285, %v1111
        %v1288 = vmax.f32 %v1286, %v1113
        %v1289 = vmax.f32 %v1287, %v1115
        %v1290 = vmax.f32 %v1288, %v1117
        %v1291 = vmax.f32 %v1289, %v1119
        %v1292 = vmax.f32 %v1290, %v1121
        %v1293 = vmax.f32 %v1291, %v1123
        %v1294 = vmax.f32 %v1292, %v1125
        %v1295 = vmax.f32 %v1293, %v1127
        %v1296 = vmax.f32 %v1294, %v1129
        %v1297 = vmax.f32 %v1295, %v1131
        %v1298 = vmax.f32 %v1296, %v1133
        %v1299 = vmax.f32 %v1297, %v1135
        %v1300 = vmax.f32 %v1298, %v1137
        %v1301 = vmax.f32 %v1299, %v1139
        %v1302 = vmax.f32 %v1300, %v1141
        %v1303 = vmax.f32 %v1301, %v1143
        %v1304 = vmax.f32 %v1302, %v1145
        %v1305 = vmax.f32 %v1303, %v1147
        %v1306 = vmax.f32 %v1304, %v1149
        %v1307 = vmax.f32 %v1305, %v1151
        %v1308 = vmax.f32 %v1306, %v1153
        %v1309 = vmax.f32 %v1307, %v1155
        %v1310 = vmax.f32 %v1308, %v1157
        %v1311 = vmax.f32 %v1309, %v1159
        %v1312 = vmax.f32 %v1310, %v1161
        %v1313 = vmax.f32 %v1311, %v1163
        %v1314 = vmax.f32 %v1312, %v1165
        %v1315 = vmax.f32 %v1313, %v1167
        %v1316 = vmax.f32 %v1314, %v1169
        %v1317 = vmax.f32 %v1315, %v1171
        %v1318 = vmax.f32 %v1316, %v1173
        %v1319 = vmax.f32 %v1317, %v1175
        %v1320 = vmax.f32 %v1318, %v1177
        %v1321 = vmax.f32 %v1319, %v1179
        %v1322 = vmax.f32 %v1320, %v1181
        %v1323 = vmax.f32 %v1321, %v1183
        %v1324 = vmax.f32 %v1322, %v1185
        %v1325 = vmax.f32 %v1323, %v1187
        %v1326 = vmax.f32 %v1324, %v1189
        %v1327 = vmax.f32 %v1325, %v1191
        %v1328 = vmax.f32 %v1326, %v1193
        %v1329 = vmax.f32 %v1327, %v1195
        %v1330 = vmax.f32 %v1328, %v1197
        %v1331 = vmax.f32 %v1329, %v1199
        %v1332 = vmax.f32 %v1330, %v1201
        %v1333 = vmax.f32 %v1331, %v1332
        %v1334 = vrot.slane %v1333, 4
        %v1335 = vmax.f32 %v1333, %v1334
        %v1336 = vrot.slane %v1335, 2
        %v1337 = vmax.f32 %v1335, %v1336
        %v1338 = vrot.slane %v1337, 1
        %v1339 = vmax.f32 %v1337, %v1338
        %v1340 = vsub.f32 %v1074, %v1270
        %v1341 = vsub.f32 %v1075, %v1339
        %v1342 = vsub.f32 %v1076, %v1270
        %v1343 = vsub.f32 %v1077, %v1339
        %v1344 = vsub.f32 %v1078, %v1270
        %v1345 = vsub.f32 %v1079, %v1339
        %v1346 = vsub.f32 %v1080, %v1270
        %v1347 = vsub.f32 %v1081, %v1339
        %v1348 = vsub.f32 %v1082, %v1270
        %v1349 = vsub.f32 %v1083, %v1339
        %v1350 = vsub.f32 %v1084, %v1270
        %v1351 = vsub.f32 %v1085, %v1339
        %v1352 = vsub.f32 %v1086, %v1270
        %v1353 = vsub.f32 %v1087, %v1339
        %v1354 = vsub.f32 %v1088, %v1270
        %v1355 = vsub.f32 %v1089, %v1339
        %v1356 = vsub.f32 %v1090, %v1270
        %v1357 = vsub.f32 %v1091, %v1339
        %v1358 = vsub.f32 %v1092, %v1270
        %v1359 = vsub.f32 %v1093, %v1339
        %v1360 = vsub.f32 %v1094, %v1270
        %v1361 = vsub.f32 %v1095, %v1339
        %v1362 = vsub.f32 %v1096, %v1270
        %v1363 = vsub.f32 %v1097, %v1339
        %v1364 = vsub.f32 %v1098, %v1270
        %v1365 = vsub.f32 %v1099, %v1339
        %v1366 = vsub.f32 %v1100, %v1270
        %v1367 = vsub.f32 %v1101, %v1339
        %v1368 = vsub.f32 %v1102, %v1270
        %v1369 = vsub.f32 %v1103, %v1339
        %v1370 = vsub.f32 %v1104, %v1270
        %v1371 = vsub.f32 %v1105, %v1339
        %v1372 = vsub.f32 %v1106, %v1270
        %v1373 = vsub.f32 %v1107, %v1339
        %v1374 = vsub.f32 %v1108, %v1270
        %v1375 = vsub.f32 %v1109, %v1339
        %v1376 = vsub.f32 %v1110, %v1270
        %v1377 = vsub.f32 %v1111, %v1339
        %v1378 = vsub.f32 %v1112, %v1270
        %v1379 = vsub.f32 %v1113, %v1339
        %v1380 = vsub.f32 %v1114, %v1270
        %v1381 = vsub.f32 %v1115, %v1339
        %v1382 = vsub.f32 %v1116, %v1270
        %v1383 = vsub.f32 %v1117, %v1339
        %v1384 = vsub.f32 %v1118, %v1270
        %v1385 = vsub.f32 %v1119, %v1339
        %v1386 = vsub.f32 %v1120, %v1270
        %v1387 = vsub.f32 %v1121, %v1339
        %v1388 = vsub.f32 %v1122, %v1270
        %v1389 = vsub.f32 %v1123, %v1339
        %v1390 = vsub.f32 %v1124, %v1270
        %v1391 = vsub.f32 %v1125, %v1339
        %v1392 = vsub.f32 %v1126, %v1270
        %v1393 = vsub.f32 %v1127, %v1339
        %v1394 = vsub.f32 %v1128, %v1270
        %v1395 = vsub.f32 %v1129, %v1339
        %v1396 = vsub.f32 %v1130, %v1270
        %v1397 = vsub.f32 %v1131, %v1339
        %v1398 = vsub.f32 %v1132, %v1270
        %v1399 = vsub.f32 %v1133, %v1339
        %v1400 = vsub.f32 %v1134, %v1270
        %v1401 = vsub.f32 %v1135, %v1339
        %v1402 = vsub.f32 %v1136, %v1270
        %v1403 = vsub.f32 %v1137, %v1339
        %v1404 = vsub.f32 %v1138, %v1270
        %v1405 = vsub.f32 %v1139, %v1339
        %v1406 = vsub.f32 %v1140, %v1270
        %v1407 = vsub.f32 %v1141, %v1339
        %v1408 = vsub.f32 %v1142, %v1270
        %v1409 = vsub.f32 %v1143, %v1339
        %v1410 = vsub.f32 %v1144, %v1270
        %v1411 = vsub.f32 %v1145, %v1339
        %v1412 = vsub.f32 %v1146, %v1270
        %v1413 = vsub.f32 %v1147, %v1339
        %v1414 = vsub.f32 %v1148, %v1270
        %v1415 = vsub.f32 %v1149, %v1339
        %v1416 = vsub.f32 %v1150, %v1270
        %v1417 = vsub.f32 %v1151, %v1339
        %v1418 = vsub.f32 %v1152, %v1270
        %v1419 = vsub.f32 %v1153, %v1339
        %v1420 = vsub.f32 %v1154, %v1270
        %v1421 = vsub.f32 %v1155, %v1339
        %v1422 = vsub.f32 %v1156, %v1270
        %v1423 = vsub.f32 %v1157, %v1339
        %v1424 = vsub.f32 %v1158, %v1270
        %v1425 = vsub.f32 %v1159, %v1339
        %v1426 = vsub.f32 %v1160, %v1270
        %v1427 = vsub.f32 %v1161, %v1339
        %v1428 = vsub.f32 %v1162, %v1270
        %v1429 = vsub.f32 %v1163, %v1339
        %v1430 = vsub.f32 %v1164, %v1270
        %v1431 = vsub.f32 %v1165, %v1339
        %v1432 = vsub.f32 %v1166, %v1270
        %v1433 = vsub.f32 %v1167, %v1339
        %v1434 = vsub.f32 %v1168, %v1270
        %v1435 = vsub.f32 %v1169, %v1339
        %v1436 = vsub.f32 %v1170, %v1270
        %v1437 = vsub.f32 %v1171, %v1339
        %v1438 = vsub.f32 %v1172, %v1270
        %v1439 = vsub.f32 %v1173, %v1339
        %v1440 = vsub.f32 %v1174, %v1270
        %v1441 = vsub.f32 %v1175, %v1339
        %v1442 = vsub.f32 %v1176, %v1270
        %v1443 = vsub.f32 %v1177, %v1339
        %v1444 = vsub.f32 %v1178, %v1270
        %v1445 = vsub.f32 %v1179, %v1339
        %v1446 = vsub.f32 %v1180, %v1270
        %v1447 = vsub.f32 %v1181, %v1339
        %v1448 = vsub.f32 %v1182, %v1270
        %v1449 = vsub.f32 %v1183, %v1339
        %v1450 = vsub.f32 %v1184, %v1270
        %v1451 = vsub.f32 %v1185, %v1339
        %v1452 = vsub.f32 %v1186, %v1270
        %v1453 = vsub.f32 %v1187, %v1339
        %v1454 = vsub.f32 %v1188, %v1270
        %v1455 = vsub.f32 %v1189, %v1339
        %v1456 = vsub.f32 %v1190, %v1270
        %v1457 = vsub.f32 %v1191, %v1339
        %v1458 = vsub.f32 %v1192, %v1270
        %v1459 = vsub.f32 %v1193, %v1339
        %v1460 = vsub.f32 %v1194, %v1270
        %v1461 = vsub.f32 %v1195, %v1339
        %v1462 = vsub.f32 %v1196, %v1270
        %v1463 = vsub.f32 %v1197, %v1339
        %v1464 = vsub.f32 %v1198, %v1270
        %v1465 = vsub.f32 %v1199, %v1339
        %v1466 = vsub.f32 %v1200, %v1270
        %v1467 = vsub.f32 %v1201, %v1339
        %v1468 = vmul.f32 %v1340, 1.442695
        %v1469 = vpow.pop %v1468
        %v1470 = vmul.f32 %v1341, 1.442695
        %v1471 = vpow.pop %v1470
        %v1472 = vmul.f32 %v1342, 1.442695
        %v1473 = vpow.pop %v1472
        %v1474 = vmul.f32 %v1343, 1.442695
        %v1475 = vpow.pop %v1474
        %v1476 = vmul.f32 %v1344, 1.442695
        %v1477 = vpow.pop %v1476
        %v1478 = vmul.f32 %v1345, 1.442695
        %v1479 = vpow.pop %v1478
        %v1480 = vmul.f32 %v1346, 1.442695
        %v1481 = vpow.pop %v1480
        %v1482 = vmul.f32 %v1347, 1.442695
        %v1483 = vpow.pop %v1482
        %v1484 = vmul.f32 %v1348, 1.442695
        %v1485 = vpow.pop %v1484
        %v1486 = vmul.f32 %v1349, 1.442695
        %v1487 = vpow.pop %v1486
        %v1488 = vmul.f32 %v1350, 1.442695
        %v1489 = vpow.pop %v1488
        %v1490 = vmul.f32 %v1351, 1.442695
        %v1491 = vpow.pop %v1490
        %v1492 = vmul.f32 %v1352, 1.442695
        %v1493 = vpow.pop %v1492
        %v1494 = vmul.f32 %v1353, 1.442695
        %v1495 = vpow.pop %v1494
        %v1496 = vmul.f32 %v1354, 1.442695
        %v1497 = vpow.pop %v1496
        %v1498 = vmul.f32 %v1355, 1.442695
        %v1499 = vpow.pop %v1498
        %v1500 = vmul.f32 %v1356, 1.442695
        %v1501 = vpow.pop %v1500
        %v1502 = vmul.f32 %v1357, 1.442695
        %v1503 = vpow.pop %v1502
        %v1504 = vmul.f32 %v1358, 1.442695
        %v1505 = vpow.pop %v1504
        %v1506 = vmul.f32 %v1359, 1.442695
        %v1507 = vpow.pop %v1506
        %v1508 = vmul.f32 %v1360, 1.442695
        %v1509 = vpow.pop %v1508
        %v1510 = vmul.f32 %v1361, 1.442695
        %v1511 = vpow.pop %v1510
        %v1512 = vmul.f32 %v1362, 1.442695
        %v1513 = vpow.pop %v1512
        %v1514 = vmul.f32 %v1363, 1.442695
        %v1515 = vpow.pop %v1514
        %v1516 = vmul.f32 %v1364, 1.442695
        %v1517 = vpow.pop %v1516
        %v1518 = vmul.f32 %v1365, 1.442695
        %v1519 = vpow.pop %v1518
        %v1520 = vmul.f32 %v1366, 1.442695
        %v1521 = vpow.pop %v1520
        %v1522 = vmul.f32 %v1367, 1.442695
        %v1523 = vpow.pop %v1522
        %v1524 = vmul.f32 %v1368, 1.442695
        %v1525 = vpow.pop %v1524
        %v1526 = vmul.f32 %v1369, 1.442695
        %v1527 = vpow.pop %v1526
        %v1528 = vmul.f32 %v1370, 1.442695
        %v1529 = vpow.pop %v1528
        %v1530 = vmul.f32 %v1371, 1.442695
        %v1531 = vpow.pop %v1530
        %v1532 = vmul.f32 %v1372, 1.442695
        %v1533 = vpow.pop %v1532
        %v1534 = vmul.f32 %v1373, 1.442695
        %v1535 = vpow.pop %v1534
        %v1536 = vmul.f32 %v1374, 1.442695
        %v1537 = vpow.pop %v1536
        %v1538 = vmul.f32 %v1375, 1.442695
        %v1539 = vpow.pop %v1538
        %v1540 = vmul.f32 %v1376, 1.442695
        %v1541 = vpow.pop %v1540
        %v1542 = vmul.f32 %v1377, 1.442695
        %v1543 = vpow.pop %v1542
        %v1544 = vmul.f32 %v1378, 1.442695
        %v1545 = vpow.pop %v1544
        %v1546 = vmul.f32 %v1379, 1.442695
        %v1547 = vpow.pop %v1546
        %v1548 = vmul.f32 %v1380, 1.442695
        %v1549 = vpow.pop %v1548
        %v1550 = vmul.f32 %v1381, 1.442695
        %v1551 = vpow.pop %v1550
        %v1552 = vmul.f32 %v1382, 1.442695
        %v1553 = vpow.pop %v1552
        %v1554 = vmul.f32 %v1383, 1.442695
        %v1555 = vpow.pop %v1554
        %v1556 = vmul.f32 %v1384, 1.442695
        %v1557 = vpow.pop %v1556
        %v1558 = vmul.f32 %v1385, 1.442695
        %v1559 = vpow.pop %v1558
        %v1560 = vmul.f32 %v1386, 1.442695
        %v1561 = vpow.pop %v1560
        %v1562 = vmul.f32 %v1387, 1.442695
        %v1563 = vpow.pop %v1562
        %v1564 = vmul.f32 %v1388, 1.442695
        %v1565 = vpow.pop %v1564
        %v1566 = vmul.f32 %v1389, 1.442695
        %v1567 = vpow.pop %v1566
        %v1568 = vmul.f32 %v1390, 1.442695
        %v1569 = vpow.pop %v1568
        %v1570 = vmul.f32 %v1391, 1.442695
        %v1571 = vpow.pop %v1570
        %v1572 = vmul.f32 %v1392, 1.442695
        %v1573 = vpow.pop %v1572
        %v1574 = vmul.f32 %v1393, 1.442695
        %v1575 = vpow.pop %v1574
        %v1576 = vmul.f32 %v1394, 1.442695
        %v1577 = vpow.pop %v1576
        %v1578 = vmul.f32 %v1395, 1.442695
        %v1579 = vpow.pop %v1578
        %v1580 = vmul.f32 %v1396, 1.442695
        %v1581 = vpow.pop %v1580
        %v1582 = vmul.f32 %v1397, 1.442695
        %v1583 = vpow.pop %v1582
        %v1584 = vmul.f32 %v1398, 1.442695
        %v1585 = vpow.pop %v1584
        %v1586 = vmul.f32 %v1399, 1.442695
        %v1587 = vpow.pop %v1586
        %v1588 = vmul.f32 %v1400, 1.442695
        %v1589 = vpow.pop %v1588
        %v1590 = vmul.f32 %v1401, 1.442695
        %v1591 = vpow.pop %v1590
        %v1592 = vmul.f32 %v1402, 1.442695
        %v1593 = vpow.pop %v1592
        %v1594 = vmul.f32 %v1403, 1.442695
        %v1595 = vpow.pop %v1594
        %v1596 = vmul.f32 %v1404, 1.442695
        %v1597 = vpow.pop %v1596
        %v1598 = vmul.f32 %v1405, 1.442695
        %v1599 = vpow.pop %v1598
        %v1600 = vmul.f32 %v1406, 1.442695
        %v1601 = vpow.pop %v1600
        %v1602 = vmul.f32 %v1407, 1.442695
        %v1603 = vpow.pop %v1602
        %v1604 = vmul.f32 %v1408, 1.442695
        %v1605 = vpow.pop %v1604
        %v1606 = vmul.f32 %v1409, 1.442695
        %v1607 = vpow.pop %v1606
        %v1608 = vmul.f32 %v1410, 1.442695
        %v1609 = vpow.pop %v1608
        %v1610 = vmul.f32 %v1411, 1.442695
        %v1611 = vpow.pop %v1610
        %v1612 = vmul.f32 %v1412, 1.442695
        %v1613 = vpow.pop %v1612
        %v1614 = vmul.f32 %v1413, 1.442695
        %v1615 = vpow.pop %v1614
        %v1616 = vmul.f32 %v1414, 1.442695
        %v1617 = vpow.pop %v1616
        %v1618 = vmul.f32 %v1415, 1.442695
        %v1619 = vpow.pop %v1618
        %v1620 = vmul.f32 %v1416, 1.442695
        %v1621 = vpow.pop %v1620
        %v1622 = vmul.f32 %v1417, 1.442695
        %v1623 = vpow.pop %v1622
        %v1624 = vmul.f32 %v1418, 1.442695
        %v1625 = vpow.pop %v1624
        %v1626 = vmul.f32 %v1419, 1.442695
        %v1627 = vpow.pop %v1626
        %v1628 = vmul.f32 %v1420, 1.442695
        %v1629 = vpow.pop %v1628
        %v1630 = vmul.f32 %v1421, 1.442695
        %v1631 = vpow.pop %v1630
        %v1632 = vmul.f32 %v1422, 1.442695
        %v1633 = vpow.pop %v1632
        %v1634 = vmul.f32 %v1423, 1.442695
        %v1635 = vpow.pop %v1634
        %v1636 = vmul.f32 %v1424, 1.442695
        %v1637 = vpow.pop %v1636
        %v1638 = vmul.f32 %v1425, 1.442695
        %v1639 = vpow.pop %v1638
        %v1640 = vmul.f32 %v1426, 1.442695
        %v1641 = vpow.pop %v1640
        %v1642 = vmul.f32 %v1427, 1.442695
        %v1643 = vpow.pop %v1642
        %v1644 = vmul.f32 %v1428, 1.442695
        %v1645 = vpow.pop %v1644
        %v1646 = vmul.f32 %v1429, 1.442695
        %v1647 = vpow.pop %v1646
        %v1648 = vmul.f32 %v1430, 1.442695
        %v1649 = vpow.pop %v1648
        %v1650 = vmul.f32 %v1431, 1.442695
        %v1651 = vpow.pop %v1650
        %v1652 = vmul.f32 %v1432, 1.442695
        %v1653 = vpow.pop %v1652
        %v1654 = vmul.f32 %v1433, 1.442695
        %v1655 = vpow.pop %v1654
        %v1656 = vmul.f32 %v1434, 1.442695
        %v1657 = vpow.pop %v1656
        %v1658 = vmul.f32 %v1435, 1.442695
        %v1659 = vpow.pop %v1658
        %v1660 = vmul.f32 %v1436, 1.442695
        %v1661 = vpow.pop %v1660
        %v1662 = vmul.f32 %v1437, 1.442695
        %v1663 = vpow.pop %v1662
        %v1664 = vmul.f32 %v1438, 1.442695
        %v1665 = vpow.pop %v1664
        %v1666 = vmul.f32 %v1439, 1.442695
        %v1667 = vpow.pop %v1666
        %v1668 = vmul.f32 %v1440, 1.442695
        %v1669 = vpow.pop %v1668
        %v1670 = vmul.f32 %v1441, 1.442695
        %v1671 = vpow.pop %v1670
        %v1672 = vmul.f32 %v1442, 1.442695
        %v1673 = vpow.pop %v1672
        %v1674 = vmul.f32 %v1443, 1.442695
        %v1675 = vpow.pop %v1674
        %v1676 = vmul.f32 %v1444, 1.442695
        %v1677 = vpow.pop %v1676
        %v1678 = vmul.f32 %v1445, 1.442695
        %v1679 = vpow.pop %v1678
        %v1680 = vmul.f32 %v1446, 1.442695
        %v1681 = vpow.pop %v1680
        %v1682 = vmul.f32 %v1447, 1.442695
        %v1683 = vpow.pop %v1682
        %v1684 = vmul.f32 %v1448, 1.442695
        %v1685 = vpow.pop %v1684
        %v1686 = vmul.f32 %v1449, 1.442695
        %v1687 = vpow.pop %v1686
        %v1688 = vmul.f32 %v1450, 1.442695
        %v1689 = vpow.pop %v1688
        %v1690 = vmul.f32 %v1451, 1.442695
        %v1691 = vpow.pop %v1690
        %v1692 = vmul.f32 %v1452, 1.442695
        %v1693 = vpow.pop %v1692
        %v1694 = vmul.f32 %v1453, 1.442695
        %v1695 = vpow.pop %v1694
        %v1696 = vmul.f32 %v1454, 1.442695
        %v1697 = vpow.pop %v1696
        %v1698 = vmul.f32 %v1455, 1.442695
        %v1699 = vpow.pop %v1698
        %v1700 = vmul.f32 %v1456, 1.442695
        %v1701 = vpow.pop %v1700
        %v1702 = vmul.f32 %v1457, 1.442695
        %v1703 = vpow.pop %v1702
        %v1704 = vmul.f32 %v1458, 1.442695
        %v1705 = vpow.pop %v1704
        %v1706 = vmul.f32 %v1459, 1.442695
        %v1707 = vpow.pop %v1706
        %v1708 = vmul.f32 %v1460, 1.442695
        %v1709 = vpow.pop %v1708
        %v1710 = vmul.f32 %v1461, 1.442695
        %v1711 = vpow.pop %v1710
        %v1712 = vmul.f32 %v1462, 1.442695
        %v1713 = vpow.pop %v1712
        %v1714 = vmul.f32 %v1463, 1.442695
        %v1715 = vpow.pop %v1714
        %v1716 = vmul.f32 %v1464, 1.442695
        %v1717 = vpow.pop %v1716
        %v1718 = vmul.f32 %v1465, 1.442695
        %v1719 = vpow.pop %v1718
        %v1720 = vmul.f32 %v1466, 1.442695
        %v1721 = vpow.pop %v1720
        %v1722 = vmul.f32 %v1467, 1.442695
        %v1723 = vpow.pop %v1722
        %v1724 = vadd.f32 %v1469, %v1473
        %v1725 = vadd.f32 %v1724, %v1477
        %v1726 = vadd.f32 %v1725, %v1481
        %v1727 = vadd.f32 %v1726, %v1485
        %v1728 = vadd.f32 %v1727, %v1489
        %v1729 = vadd.f32 %v1728, %v1493
        %v1730 = vadd.f32 %v1729, %v1497
        %v1731 = vadd.f32 %v1730, %v1501
        %v1732 = vadd.f32 %v1731, %v1505
        %v1733 = vadd.f32 %v1732, %v1509
        %v1734 = vadd.f32 %v1733, %v1513
        %v1735 = vadd.f32 %v1734, %v1517
        %v1736 = vadd.f32 %v1735, %v1521
        %v1737 = vadd.f32 %v1736, %v1525
        %v1738 = vadd.f32 %v1737, %v1529
        %v1739 = vadd.f32 %v1738, %v1533
        %v1740 = vadd.f32 %v1739, %v1537
        %v1741 = vadd.f32 %v1740, %v1541
        %v1742 = vadd.f32 %v1741, %v1545
        %v1743 = vadd.f32 %v1742, %v1549
        %v1744 = vadd.f32 %v1743, %v1553
        %v1745 = vadd.f32 %v1744, %v1557
        %v1746 = vadd.f32 %v1745, %v1561
        %v1747 = vadd.f32 %v1746, %v1565
        %v1748 = vadd.f32 %v1747, %v1569
        %v1749 = vadd.f32 %v1748, %v1573
        %v1750 = vadd.f32 %v1749, %v1577
        %v1751 = vadd.f32 %v1750, %v1581
        %v1752 = vadd.f32 %v1751, %v1585
        %v1753 = vadd.f32 %v1752, %v1589
        %v1754 = vadd.f32 %v1753, %v1593
        %v1755 = vadd.f32 %v1754, %v1597
        %v1756 = vadd.f32 %v1755, %v1601
        %v1757 = vadd.f32 %v1756, %v1605
        %v1758 = vadd.f32 %v1757, %v1609
        %v1759 = vadd.f32 %v1758, %v1613
        %v1760 = vadd.f32 %v1759, %v1617
        %v1761 = vadd.f32 %v1760, %v1621
        %v1762 = vadd.f32 %v1761, %v1625
        %v1763 = vadd.f32 %v1762, %v1629
        %v1764 = vadd.f32 %v1763, %v1633
        %v1765 = vadd.f32 %v1764, %v1637
        %v1766 = vadd.f32 %v1765, %v1641
        %v1767 = vadd.f32 %v1766, %v1645
        %v1768 = vadd.f32 %v1767, %v1649
        %v1769 = vadd.f32 %v1768, %v1653
        %v1770 = vadd.f32 %v1769, %v1657
        %v1771 = vadd.f32 %v1770, %v1661
        %v1772 = vadd.f32 %v1771, %v1665
        %v1773 = vadd.f32 %v1772, %v1669
        %v1774 = vadd.f32 %v1773, %v1673
        %v1775 = vadd.f32 %v1774, %v1677
        %v1776 = vadd.f32 %v1775, %v1681
        %v1777 = vadd.f32 %v1776, %v1685
        %v1778 = vadd.f32 %v1777, %v1689
        %v1779 = vadd.f32 %v1778, %v1693
        %v1780 = vadd.f32 %v1779, %v1697
        %v1781 = vadd.f32 %v1780, %v1701
        %v1782 = vadd.f32 %v1781, %v1705
        %v1783 = vadd.f32 %v1782, %v1709
        %v1784 = vadd.f32 %v1783, %v1713
        %v1785 = vadd.f32 %v1784, %v1717
        %v1786 = vadd.f32 %v1785, %v1721
        %v1787 = vrot.slane %v1786, 4
        %v1788 = vadd.f32 %v1786, %v1787
        %v1789 = vrot.slane %v1788, 2
        %v1790 = vadd.f32 %v1788, %v1789
        %v1791 = vrot.slane %v1790, 1
        %v1792 = vadd.f32 %v1790, %v1791
        %v1793 = vadd.f32 %v1471, %v1475
        %v1794 = vadd.f32 %v1793, %v1479
        %v1795 = vadd.f32 %v1794, %v1483
        %v1796 = vadd.f32 %v1795, %v1487
        %v1797 = vadd.f32 %v1796, %v1491
        %v1798 = vadd.f32 %v1797, %v1495
        %v1799 = vadd.f32 %v1798, %v1499
        %v1800 = vadd.f32 %v1799, %v1503
        %v1801 = vadd.f32 %v1800, %v1507
        %v1802 = vadd.f32 %v1801, %v1511
        %v1803 = vadd.f32 %v1802, %v1515
        %v1804 = vadd.f32 %v1803, %v1519
        %v1805 = vadd.f32 %v1804, %v1523
        %v1806 = vadd.f32 %v1805, %v1527
        %v1807 = vadd.f32 %v1806, %v1531
        %v1808 = vadd.f32 %v1807, %v1535
        %v1809 = vadd.f32 %v1808, %v1539
        %v1810 = vadd.f32 %v1809, %v1543
        %v1811 = vadd.f32 %v1810, %v1547
        %v1812 = vadd.f32 %v1811, %v1551
        %v1813 = vadd.f32 %v1812, %v1555
        %v1814 = vadd.f32 %v1813, %v1559
        %v1815 = vadd.f32 %v1814, %v1563
        %v1816 = vadd.f32 %v1815, %v1567
        %v1817 = vadd.f32 %v1816, %v1571
        %v1818 = vadd.f32 %v1817, %v1575
        %v1819 = vadd.f32 %v1818, %v1579
        %v1820 = vadd.f32 %v1819, %v1583
        %v1821 = vadd.f32 %v1820, %v1587
        %v1822 = vadd.f32 %v1821, %v1591
        %v1823 = vadd.f32 %v1822, %v1595
        %v1824 = vadd.f32 %v1823, %v1599
        %v1825 = vadd.f32 %v1824, %v1603
        %v1826 = vadd.f32 %v1825, %v1607
        %v1827 = vadd.f32 %v1826, %v1611
        %v1828 = vadd.f32 %v1827, %v1615
        %v1829 = vadd.f32 %v1828, %v1619
        %v1830 = vadd.f32 %v1829, %v1623
        %v1831 = vadd.f32 %v1830, %v1627
        %v1832 = vadd.f32 %v1831, %v1631
        %v1833 = vadd.f32 %v1832, %v1635
        %v1834 = vadd.f32 %v1833, %v1639
        %v1835 = vadd.f32 %v1834, %v1643
        %v1836 = vadd.f32 %v1835, %v1647
        %v1837 = vadd.f32 %v1836, %v1651
        %v1838 = vadd.f32 %v1837, %v1655
        %v1839 = vadd.f32 %v1838, %v1659
        %v1840 = vadd.f32 %v1839, %v1663
        %v1841 = vadd.f32 %v1840, %v1667
        %v1842 = vadd.f32 %v1841, %v1671
        %v1843 = vadd.f32 %v1842, %v1675
        %v1844 = vadd.f32 %v1843, %v1679
        %v1845 = vadd.f32 %v1844, %v1683
        %v1846 = vadd.f32 %v1845, %v1687
        %v1847 = vadd.f32 %v1846, %v1691
        %v1848 = vadd.f32 %v1847, %v1695
        %v1849 = vadd.f32 %v1848, %v1699
        %v1850 = vadd.f32 %v1849, %v1703
        %v1851 = vadd.f32 %v1850, %v1707
        %v1852 = vadd.f32 %v1851, %v1711
        %v1853 = vadd.f32 %v1852, %v1715
        %v1854 = vadd.f32 %v1853, %v1719
        %v1855 = vadd.f32 %v1854, %v1723
        %v1856 = vrot.slane %v1855, 4
        %v1857 = vadd.f32 %v1855, %v1856
        %v1858 = vrot.slane %v1857, 2
        %v1859 = vadd.f32 %v1857, %v1858
        %v1860 = vrot.slane %v1859, 1
        %v1861 = vadd.f32 %v1859, %v1860
        %v1862 = vrcp.pop %v1792
        %v1863 = vrcp.pop %v1861
        %v1864 = vmul.f32 %v1469, %v1862
        %v1865 = vmul.f32 %v1471, %v1863
        %v1866 = vmul.f32 %v1473, %v1862
        %v1867 = vmul.f32 %v1475, %v1863
        %v1868 = vmul.f32 %v1477, %v1862
        %v1869 = vmul.f32 %v1479, %v1863
        %v1870 = vmul.f32 %v1481, %v1862
        %v1871 = vmul.f32 %v1483, %v1863
        %v1872 = vmul.f32 %v1485, %v1862
        %v1873 = vmul.f32 %v1487, %v1863
        %v1874 = vmul.f32 %v1489, %v1862
        %v1875 = vmul.f32 %v1491, %v1863
        %v1876 = vmul.f32 %v1493, %v1862
        %v1877 = vmul.f32 %v1495, %v1863
        %v1878 = vmul.f32 %v1497, %v1862
        %v1879 = vmul.f32 %v1499, %v1863
        %v1880 = vmul.f32 %v1501, %v1862
        %v1881 = vmul.f32 %v1503, %v1863
        %v1882 = vmul.f32 %v1505, %v1862
        %v1883 = vmul.f32 %v1507, %v1863
        %v1884 = vmul.f32 %v1509, %v1862
        %v1885 = vmul.f32 %v1511, %v1863
        %v1886 = vmul.f32 %v1513, %v1862
        %v1887 = vmul.f32 %v1515, %v1863
        %v1888 = vmul.f32 %v1517, %v1862
        %v1889 = vmul.f32 %v1519, %v1863
        %v1890 = vmul.f32 %v1521, %v1862
        %v1891 = vmul.f32 %v1523, %v1863
        %v1892 = vmul.f32 %v1525, %v1862
        %v1893 = vmul.f32 %v1527, %v1863
        %v1894 = vmul.f32 %v1529, %v1862
        %v1895 = vmul.f32 %v1531, %v1863
        %v1896 = vmul.f32 %v1533, %v1862
        %v1897 = vmul.f32 %v1535, %v1863
        %v1898 = vmul.f32 %v1537, %v1862
        %v1899 = vmul.f32 %v1539, %v1863
        %v1900 = vmul.f32 %v1541, %v1862
        %v1901 = vmul.f32 %v1543, %v1863
        %v1902 = vmul.f32 %v1545, %v1862
        %v1903 = vmul.f32 %v1547, %v1863
        %v1904 = vmul.f32 %v1549, %v1862
        %v1905 = vmul.f32 %v1551, %v1863
        %v1906 = vmul.f32 %v1553, %v1862
        %v1907 = vmul.f32 %v1555, %v1863
        %v1908 = vmul.f32 %v1557, %v1862
        %v1909 = vmul.f32 %v1559, %v1863
        %v1910 = vmul.f32 %v1561, %v1862
        %v1911 = vmul.f32 %v1563, %v1863
        %v1912 = vmul.f32 %v1565, %v1862
        %v1913 = vmul.f32 %v1567, %v1863
        %v1914 = vmul.f32 %v1569, %v1862
        %v1915 = vmul.f32 %v1571, %v1863
        %v1916 = vmul.f32 %v1573, %v1862
        %v1917 = vmul.f32 %v1575, %v1863
        %v1918 = vmul.f32 %v1577, %v1862
        %v1919 = vmul.f32 %v1579, %v1863
        %v1920 = vmul.f32 %v1581, %v1862
        %v1921 = vmul.f32 %v1583, %v1863
        %v1922 = vmul.f32 %v1585, %v1862
        %v1923 = vmul.f32 %v1587, %v1863
        %v1924 = vmul.f32 %v1589, %v1862
        %v1925 = vmul.f32 %v1591, %v1863
        %v1926 = vmul.f32 %v1593, %v1862
        %v1927 = vmul.f32 %v1595, %v1863
        %v1928 = vmul.f32 %v1597, %v1862
        %v1929 = vmul.f32 %v1599, %v1863
        %v1930 = vmul.f32 %v1601, %v1862
        %v1931 = vmul.f32 %v1603, %v1863
        %v1932 = vmul.f32 %v1605, %v1862
        %v1933 = vmul.f32 %v1607, %v1863
        %v1934 = vmul.f32 %v1609, %v1862
        %v1935 = vmul.f32 %v1611, %v1863
        %v1936 = vmul.f32 %v1613, %v1862
        %v1937 = vmul.f32 %v1615, %v1863
        %v1938 = vmul.f32 %v1617, %v1862
        %v1939 = vmul.f32 %v1619, %v1863
        %v1940 = vmul.f32 %v1621, %v1862
        %v1941 = vmul.f32 %v1623, %v1863
        %v1942 = vmul.f32 %v1625, %v1862
        %v1943 = vmul.f32 %v1627, %v1863
        %v1944 = vmul.f32 %v1629, %v1862
        %v1945 = vmul.f32 %v1631, %v1863
        %v1946 = vmul.f32 %v1633, %v1862
        %v1947 = vmul.f32 %v1635, %v1863
        %v1948 = vmul.f32 %v1637, %v1862
        %v1949 = vmul.f32 %v1639, %v1863
        %v1950 = vmul.f32 %v1641, %v1862
        %v1951 = vmul.f32 %v1643, %v1863
        %v1952 = vmul.f32 %v1645, %v1862
        %v1953 = vmul.f32 %v1647, %v1863
        %v1954 = vmul.f32 %v1649, %v1862
        %v1955 = vmul.f32 %v1651, %v1863
        %v1956 = vmul.f32 %v1653, %v1862
        %v1957 = vmul.f32 %v1655, %v1863
        %v1958 = vmul.f32 %v1657, %v1862
        %v1959 = vmul.f32 %v1659, %v1863
        %v1960 = vmul.f32 %v1661, %v1862
        %v1961 = vmul.f32 %v1663, %v1863
        %v1962 = vmul.f32 %v1665, %v1862
        %v1963 = vmul.f32 %v1667, %v1863
        %v1964 = vmul.f32 %v1669, %v1862
        %v1965 = vmul.f32 %v1671, %v1863
        %v1966 = vmul.f32 %v1673, %v1862
        %v1967 = vmul.f32 %v1675, %v1863
        %v1968 = vmul.f32 %v1677, %v1862
        %v1969 = vmul.f32 %v1679, %v1863
        %v1970 = vmul.f32 %v1681, %v1862
        %v1971 = vmul.f32 %v1683, %v1863
        %v1972 = vmul.f32 %v1685, %v1862
        %v1973 = vmul.f32 %v1687, %v1863
        %v1974 = vmul.f32 %v1689, %v1862
        %v1975 = vmul.f32 %v1691, %v1863
        %v1976 = vmul.f32 %v1693, %v1862
        %v1977 = vmul.f32 %v1695, %v1863
        %v1978 = vmul.f32 %v1697, %v1862
        %v1979 = vmul.f32 %v1699, %v1863
        %v1980 = vmul.f32 %v1701, %v1862
        %v1981 = vmul.f32 %v1703, %v1863
        %v1982 = vmul.f32 %v1705, %v1862
        %v1983 = vmul.f32 %v1707, %v1863
        %v1984 = vmul.f32 %v1709, %v1862
        %v1985 = vmul.f32 %v1711, %v1863
        %v1986 = vmul.f32 %v1713, %v1862
        %v1987 = vmul.f32 %v1715, %v1863
        %v1988 = vmul.f32 %v1717, %v1862
        %v1989 = vmul.f32 %v1719, %v1863
        %v1990 = vmul.f32 %v1721, %v1862
        %v1991 = vmul.f32 %v1723, %v1863
        %1992 = vst [vmem:[%s304] sm:$0xff] %v1864
        %1993 = vst [vmem:[%s304 + $0x8] sm:$0xff] %v1865
        %1994 = vst [vmem:[%s304 + $0x10] sm:$0xff] %v1866
        %1995 = vst [vmem:[%s304 + $0x18] sm:$0xff] %v1867
        %1996 = vst [vmem:[%s304 + $0x20] sm:$0xff] %v1868
        %1997 = vst [vmem:[%s304 + $0x28] sm:$0xff] %v1869
        %1998 = vst [vmem:[%s304 + $0x30] sm:$0xff] %v1870
        %1999 = vst [vmem:[%s304 + $0x38] sm:$0xff] %v1871
        %2000 = vst [vmem:[%s304 + $0x40] sm:$0xff] %v1872
        %2001 = vst [vmem:[%s304 + $0x48] sm:$0xff] %v1873
        %2002 = vst [vmem:[%s304 + $0x50] sm:$0xff] %v1874
        %2003 = vst [vmem:[%s304 + $0x58] sm:$0xff] %v1875
        %2004 = vst [vmem:[%s304 + $0x60] sm:$0xff] %v1876
        %2005 = vst [vmem:[%s304 + $0x68] sm:$0xff] %v1877
        %2006 = vst [vmem:[%s304 + $0x70] sm:$0xff] %v1878
        %2007 = vst [vmem:[%s304 + $0x78] sm:$0xff] %v1879
        %2008 = vst [vmem:[%s304 + $0x80] sm:$0xff] %v1880
        %2009 = vst [vmem:[%s304 + $0x88] sm:$0xff] %v1881
        %2010 = vst [vmem:[%s304 + $0x90] sm:$0xff] %v1882
        %2011 = vst [vmem:[%s304 + $0x98] sm:$0xff] %v1883
        %2012 = vst [vmem:[%s304 + $0xa0] sm:$0xff] %v1884
        %2013 = vst [vmem:[%s304 + $0xa8] sm:$0xff] %v1885
        %2014 = vst [vmem:[%s304 + $0xb0] sm:$0xff] %v1886
        %2015 = vst [vmem:[%s304 + $0xb8] sm:$0xff] %v1887
        %2016 = vst [vmem:[%s304 + $0xc0] sm:$0xff] %v1888
        %2017 = vst [vmem:[%s304 + $0xc8] sm:$0xff] %v1889
        %2018 = vst [vmem:[%s304 + $0xd0] sm:$0xff] %v1890
        %2019 = vst [vmem:[%s304 + $0xd8] sm:$0xff] %v1891
        %2020 = vst [vmem:[%s304 + $0xe0] sm:$0xff] %v1892
        %2021 = vst [vmem:[%s304 + $0xe8] sm:$0xff] %v1893
        %2022 = vst [vmem:[%s304 + $0xf0] sm:$0xff] %v1894
        %2023 = vst [vmem:[%s304 + $0xf8] sm:$0xff] %v1895
        %2024 = vst [vmem:[%s304 + $0x100] sm:$0xff] %v1896
        %2025 = vst [vmem:[%s304 + $0x108] sm:$0xff] %v1897
        %2026 = vst [vmem:[%s304 + $0x110] sm:$0xff] %v1898
        %2027 = vst [vmem:[%s304 + $0x118] sm:$0xff] %v1899
        %2028 = vst [vmem:[%s304 + $0x120] sm:$0xff] %v1900
        %2029 = vst [vmem:[%s304 + $0x128] sm:$0xff] %v1901
        %2030 = vst [vmem:[%s304 + $0x130] sm:$0xff] %v1902
        %2031 = vst [vmem:[%s304 + $0x138] sm:$0xff] %v1903
        %2032 = vst [vmem:[%s304 + $0x140] sm:$0xff] %v1904
        %2033 = vst [vmem:[%s304 + $0x148] sm:$0xff] %v1905
        %2034 = vst [vmem:[%s304 + $0x150] sm:$0xff] %v1906
        %2035 = vst [vmem:[%s304 + $0x158] sm:$0xff] %v1907
        %2036 = vst [vmem:[%s304 + $0x160] sm:$0xff] %v1908
        %2037 = vst [vmem:[%s304 + $0x168] sm:$0xff] %v1909
        %2038 = vst [vmem:[%s304 + $0x170] sm:$0xff] %v1910
        %2039 = vst [vmem:[%s304 + $0x178] sm:$0xff] %v1911
        %2040 = vst [vmem:[%s304 + $0x180] sm:$0xff] %v1912
        %2041 = vst [vmem:[%s304 + $0x188] sm:$0xff] %v1913
        %2042 = vst [vmem:[%s304 + $0x190] sm:$0xff] %v1914
        %2043 = vst [vmem:[%s304 + $0x198] sm:$0xff] %v1915
        %2044 = vst [vmem:[%s304 + $0x1a0] sm:$0xff] %v1916
        %2045 = vst [vmem:[%s304 + $0x1a8] sm:$0xff] %v1917
        %2046 = vst [vmem:[%s304 + $0x1b0] sm:$0xff] %v1918
        %2047 = vst [vmem:[%s304 + $0x1b8] sm:$0xff] %v1919
        %2048 = vst [vmem:[%s304 + $0x1c0] sm:$0xff] %v1920
        %2049 = vst [vmem:[%s304 + $0x1c8] sm:$0xff] %v1921
        %2050 = vst [vmem:[%s304 + $0x1d0] sm:$0xff] %v1922
        %2051 = vst [vmem:[%s304 + $0x1d8] sm:$0xff] %v1923
        %2052 = vst [vmem:[%s304 + $0x1e0] sm:$0xff] %v1924
        %2053 = vst [vmem:[%s304 + $0x1e8] sm:$0xff] %v1925
        %2054 = vst [vmem:[%s304 + $0x1f0] sm:$0xff] %v1926
        %2055 = vst [vmem:[%s304 + $0x1f8] sm:$0xff] %v1927
        %2056 = vst [vmem:[%s304 + $0x200] sm:$0xff] %v1928
        %2057 = vst [vmem:[%s304 + $0x208] sm:$0xff] %v1929
        %2058 = vst [vmem:[%s304 + $0x210] sm:$0xff] %v1930
        %2059 = vst [vmem:[%s304 + $0x218] sm:$0xff] %v1931
        %2060 = vst [vmem:[%s304 + $0x220] sm:$0xff] %v1932
        %2061 = vst [vmem:[%s304 + $0x228] sm:$0xff] %v1933
        %2062 = vst [vmem:[%s304 + $0x230] sm:$0xff] %v1934
        %2063 = vst [vmem:[%s304 + $0x238] sm:$0xff] %v1935
        %2064 = vst [vmem:[%s304 + $0x240] sm:$0xff] %v1936
        %2065 = vst [vmem:[%s304 + $0x248] sm:$0xff] %v1937
        %2066 = vst [vmem:[%s304 + $0x250] sm:$0xff] %v1938
        %2067 = vst [vmem:[%s304 + $0x258] sm:$0xff] %v1939
        %2068 = vst [vmem:[%s304 + $0x260] sm:$0xff] %v1940
        %2069 = vst [vmem:[%s304 + $0x268] sm:$0xff] %v1941
        %2070 = vst [vmem:[%s304 + $0x270] sm:$0xff] %v1942
        %2071 = vst [vmem:[%s304 + $0x278] sm:$0xff] %v1943
        %2072 = vst [vmem:[%s304 + $0x280] sm:$0xff] %v1944
        %2073 = vst [vmem:[%s304 + $0x288] sm:$0xff] %v1945
        %2074 = vst [vmem:[%s304 + $0x290] sm:$0xff] %v1946
        %2075 = vst [vmem:[%s304 + $0x298] sm:$0xff] %v1947
        %2076 = vst [vmem:[%s304 + $0x2a0] sm:$0xff] %v1948
        %2077 = vst [vmem:[%s304 + $0x2a8] sm:$0xff] %v1949
        %2078 = vst [vmem:[%s304 + $0x2b0] sm:$0xff] %v1950
        %2079 = vst [vmem:[%s304 + $0x2b8] sm:$0xff] %v1951
        %2080 = vst [vmem:[%s304 + $0x2c0] sm:$0xff] %v1952
        %2081 = vst [vmem:[%s304 + $0x2c8] sm:$0xff] %v1953
        %2082 = vst [vmem:[%s304 + $0x2d0] sm:$0xff] %v1954
        %2083 = vst [vmem:[%s304 + $0x2d8] sm:$0xff] %v1955
        %2084 = vst [vmem:[%s304 + $0x2e0] sm:$0xff] %v1956
        %2085 = vst [vmem:[%s304 + $0x2e8] sm:$0xff] %v1957
        %2086 = vst [vmem:[%s304 + $0x2f0] sm:$0xff] %v1958
        %2087 = vst [vmem:[%s304 + $0x2f8] sm:$0xff] %v1959
        %2088 = vst [vmem:[%s304 + $0x300] sm:$0xff] %v1960
        %2089 = vst [vmem:[%s304 + $0x308] sm:$0xff] %v1961
        %2090 = vst [vmem:[%s304 + $0x310] sm:$0xff] %v1962
        %2091 = vst [vmem:[%s304 + $0x318] sm:$0xff] %v1963
        %2092 = vst [vmem:[%s304 + $0x320] sm:$0xff] %v1964
        %2093 = vst [vmem:[%s304 + $0x328] sm:$0xff] %v1965
        %2094 = vst [vmem:[%s304 + $0x330] sm:$0xff] %v1966
        %2095 = vst [vmem:[%s304 + $0x338] sm:$0xff] %v1967
        %2096 = vst [vmem:[%s304 + $0x340] sm:$0xff] %v1968
        %2097 = vst [vmem:[%s304 + $0x348] sm:$0xff] %v1969
        %2098 = vst [vmem:[%s304 + $0x350] sm:$0xff] %v1970
        %2099 = vst [vmem:[%s304 + $0x358] sm:$0xff] %v1971
        %2100 = vst [vmem:[%s304 + $0x360] sm:$0xff] %v1972
        %2101 = vst [vmem:[%s304 + $0x368] sm:$0xff] %v1973
        %2102 = vst [vmem:[%s304 + $0x370] sm:$0xff] %v1974
        %2103 = vst [vmem:[%s304 + $0x378] sm:$0xff] %v1975
        %2104 = vst [vmem:[%s304 + $0x380] sm:$0xff] %v1976
        %2105 = vst [vmem:[%s304 + $0x388] sm:$0xff] %v1977
        %2106 = vst [vmem:[%s304 + $0x390] sm:$0xff] %v1978
        %2107 = vst [vmem:[%s304 + $0x398] sm:$0xff] %v1979
        %2108 = vst [vmem:[%s304 + $0x3a0] sm:$0xff] %v1980
        %2109 = vst [vmem:[%s304 + $0x3a8] sm:$0xff] %v1981
        %2110 = vst [vmem:[%s304 + $0x3b0] sm:$0xff] %v1982
        %2111 = vst [vmem:[%s304 + $0x3b8] sm:$0xff] %v1983
        %2112 = vst [vmem:[%s304 + $0x3c0] sm:$0xff] %v1984
        %2113 = vst [vmem:[%s304 + $0x3c8] sm:$0xff] %v1985
        %2114 = vst [vmem:[%s304 + $0x3d0] sm:$0xff] %v1986
        %2115 = vst [vmem:[%s304 + $0x3d8] sm:$0xff] %v1987
        %2116 = vst [vmem:[%s304 + $0x3e0] sm:$0xff] %v1988
        %2117 = vst [vmem:[%s304 + $0x3e8] sm:$0xff] %v1989
        %2118 = vst [vmem:[%s304 + $0x3f0] sm:$0xff] %v1990
        %2119 = vst [vmem:[%s304 + $0x3f8] sm:$0xff] %v1991
        %2120 = vmatprep.subr.mxu0 %v1865
        %2121 = vmatpush1.msra.mxu0 %v1864
        %2122 = vmatprep.subr.mxu0 %v1867
        %2123 = vmatpush1.msra.mxu0 %v1866
        %2124 = vmatprep.subr.mxu0 %v1869
        %2125 = vmatpush1.msra.mxu0 %v1868
        %2126 = vmatprep.subr.mxu0 %v1871
        %2127 = vmatpush1.msra.mxu0 %v1870
        %2128 = vmatprep.subr.mxu0 %v1873
        %2129 = vmatpush1.msra.mxu0 %v1872
        %2130 = vmatprep.subr.mxu0 %v1875
        %2131 = vmatpush1.msra.mxu0 %v1874
        %2132 = vmatprep.subr.mxu0 %v1877
        %2133 = vmatpush1.msra.mxu0 %v1876
        %2134 = vmatprep.subr.mxu0 %v1879
        %2135 = vmatpush1.msra.mxu0 %v1878
        %2136 = vmatprep.subr.mxu0 %v1881
        %2137 = vmatpush1.msra.mxu0 %v1880
        %2138 = vmatprep.subr.mxu0 %v1883
        %2139 = vmatpush1.msra.mxu0 %v1882
        %2140 = vmatprep.subr.mxu0 %v1885
        %2141 = vmatpush1.msra.mxu0 %v1884
        %2142 = vmatprep.subr.mxu0 %v1887
        %2143 = vmatpush1.msra.mxu0 %v1886
        %2144 = vmatprep.subr.mxu0 %v1889
        %2145 = vmatpush1.msra.mxu0 %v1888
        %2146 = vmatprep.subr.mxu0 %v1891
        %2147 = vmatpush1.msra.mxu0 %v1890
        %2148 = vmatprep.subr.mxu0 %v1893
        %2149 = vmatpush1.msra.mxu0 %v1892
        %2150 = vmatprep.subr.mxu0 %v1895
        %2151 = vmatpush1.msra.mxu0 %v1894
        %2152 = vmatprep.subr.mxu0 %v1897
        %2153 = vmatpush1.msra.mxu0 %v1896
        %2154 = vmatprep.subr.mxu0 %v1899
        %2155 = vmatpush1.msra.mxu0 %v1898
        %2156 = vmatprep.subr.mxu0 %v1901
        %2157 = vmatpush1.msra.mxu0 %v1900
        %2158 = vmatprep.subr.mxu0 %v1903
        %2159 = vmatpush1.msra.mxu0 %v1902
        %2160 = vmatprep.subr.mxu0 %v1905
        %2161 = vmatpush1.msra.mxu0 %v1904
        %2162 = vmatprep.subr.mxu0 %v1907
        %2163 = vmatpush1.msra.mxu0 %v1906
        %2164 = vmatprep.subr.mxu0 %v1909
        %2165 = vmatpush1.msra.mxu0 %v1908
        %2166 = vmatprep.subr.mxu0 %v1911
        %2167 = vmatpush1.msra.mxu0 %v1910
        %2168 = vmatprep.subr.mxu0 %v1913
        %2169 = vmatpush1.msra.mxu0 %v1912
        %2170 = vmatprep.subr.mxu0 %v1915
        %2171 = vmatpush1.msra.mxu0 %v1914
        %2172 = vmatprep.subr.mxu0 %v1917
        %2173 = vmatpush1.msra.mxu0 %v1916
        %2174 = vmatprep.subr.mxu0 %v1919
        %2175 = vmatpush1.msra.mxu0 %v1918
        %2176 = vmatprep.subr.mxu0 %v1921
        %2177 = vmatpush1.msra.mxu0 %v1920
        %2178 = vmatprep.subr.mxu0 %v1923
        %2179 = vmatpush1.msra.mxu0 %v1922
        %2180 = vmatprep.subr.mxu0 %v1925
        %2181 = vmatpush1.msra.mxu0 %v1924
        %2182 = vmatprep.subr.mxu0 %v1927
        %2183 = vmatpush1.msra.mxu0 %v1926
        %2184 = vmatprep.mubr.f32.mxu0 %v417
        %2185 = vmatmul.mubr.f32.gmra.mrb[0].mxu0 %v416
        %v2186 = vpop.f32.mrb[0].mxu0
        %v2187 = vadd.f32 0.0, %v2186
        %v2188 = vpop.f32.mrb[0].mxu0
        %v2189 = vadd.f32 0.0, %v2188
        %2190 = vmatprep.mubr.f32.mxu0 %v421
        %2191 = vmatmul.mubr.f32.gmra.mrb[0].mxu0 %v420
        %v2192 = vpop.f32.mrb[0].mxu0
        %v2193 = vadd.f32 0.0, %v2192
        %v2194 = vpop.f32.mrb[0].mxu0
        %v2195 = vadd.f32 0.0, %v2194
        %2196 = vmatprep.mubr.f32.mxu0 %v425
        %2197 = vmatmul.mubr.f32.gmra.mrb[0].mxu0 %v424
        %v2198 = vpop.f32.mrb[0].mxu0
        %v2199 = vadd.f32 0.0, %v2198
        %v2200 = vpop.f32.mrb[0].mxu0
        %v2201 = vadd.f32 0.0, %v2200
        %2202 = vmatprep.mubr.f32.mxu0 %v429
        %2203 = vmatmul.mubr.f32.gmra.mrb[0].mxu0 %v428
        %v2204 = vpop.f32.mrb[0].mxu0
        %v2205 = vadd.f32 0.0, %v2204
        %v2206 = vpop.f32.mrb[0].mxu0
        %v2207 = vadd.f32 0.0, %v2206
        %2208 = vdwg.mxu0
        %2209 = vmatprep.subr.mxu0 %v1929
        %2210 = vmatpush1.msra.mxu0 %v1928
        %2211 = vmatprep.subr.mxu0 %v1931
        %2212 = vmatpush1.msra.mxu0 %v1930
        %2213 = vmatprep.subr.mxu0 %v1933
        %2214 = vmatpush1.msra.mxu0 %v1932
        %2215 = vmatprep.subr.mxu0 %v1935
        %2216 = vmatpush1.msra.mxu0 %v1934
        %2217 = vmatprep.subr.mxu0 %v1937
        %2218 = vmatpush1.msra.mxu0 %v1936
        %2219 = vmatprep.subr.mxu0 %v1939
        %2220 = vmatpush1.msra.mxu0 %v1938
        %2221 = vmatprep.subr.mxu0 %v1941
        %2222 = vmatpush1.msra.mxu0 %v1940
        %2223 = vmatprep.subr.mxu0 %v1943
        %2224 = vmatpush1.msra.mxu0 %v1942
        %2225 = vmatprep.subr.mxu0 %v1945
        %2226 = vmatpush1.msra.mxu0 %v1944
        %2227 = vmatprep.subr.mxu0 %v1947
        %2228 = vmatpush1.msra.mxu0 %v1946
        %2229 = vmatprep.subr.mxu0 %v1949
        %2230 = vmatpush1.msra.mxu0 %v1948
        %2231 = vmatprep.subr.mxu0 %v1951
        %2232 = vmatpush1.msra.mxu0 %v1950
        %2233 = vmatprep.subr.mxu0 %v1953
        %2234 = vmatpush1.msra.mxu0 %v1952
        %2235 = vmatprep.subr.mxu0 %v1955
        %2236 = vmatpush1.msra.mxu0 %v1954
        %2237 = vmatprep.subr.mxu0 %v1957
        %2238 = vmatpush1.msra.mxu0 %v1956
        %2239 = vmatprep.subr.mxu0 %v1959
        %2240 = vmatpush1.msra.mxu0 %v1958
        %2241 = vmatprep.subr.mxu0 %v1961
        %2242 = vmatpush1.msra.mxu0 %v1960
        %2243 = vmatprep.subr.mxu0 %v1963
        %2244 = vmatpush1.msra.mxu0 %v1962
        %2245 = vmatprep.subr.mxu0 %v1965
        %2246 = vmatpush1.msra.mxu0 %v1964
        %2247 = vmatprep.subr.mxu0 %v1967
        %2248 = vmatpush1.msra.mxu0 %v1966
        %2249 = vmatprep.subr.mxu0 %v1969
        %2250 = vmatpush1.msra.mxu0 %v1968
        %2251 = vmatprep.subr.mxu0 %v1971
        %2252 = vmatpush1.msra.mxu0 %v1970
        %2253 = vmatprep.subr.mxu0 %v1973
        %2254 = vmatpush1.msra.mxu0 %v1972
        %2255 = vmatprep.subr.mxu0 %v1975
        %2256 = vmatpush1.msra.mxu0 %v1974
        %2257 = vmatprep.subr.mxu0 %v1977
        %2258 = vmatpush1.msra.mxu0 %v1976
        %2259 = vmatprep.subr.mxu0 %v1979
        %2260 = vmatpush1.msra.mxu0 %v1978
        %2261 = vmatprep.subr.mxu0 %v1981
        %2262 = vmatpush1.msra.mxu0 %v1980
        %2263 = vmatprep.subr.mxu0 %v1983
        %2264 = vmatpush1.msra.mxu0 %v1982
        %2265 = vmatprep.subr.mxu0 %v1985
        %2266 = vmatpush1.msra.mxu0 %v1984
        %2267 = vmatprep.subr.mxu0 %v1987
        %2268 = vmatpush1.msra.mxu0 %v1986
        %2269 = vmatprep.subr.mxu0 %v1989
        %2270 = vmatpush1.msra.mxu0 %v1988
        %2271 = vmatprep.subr.mxu0 %v1991
        %2272 = vmatpush1.msra.mxu0 %v1990
        %2273 = vmatprep.mubr.f32.mxu0 %v419
        %2274 = vmatmul.mubr.f32.gmra.mrb[0].mxu0 %v418
        %v2275 = vpop.f32.mrb[0].mxu0
        %v2276 = vadd.f32 %v2187, %v2275
        %v2277 = vpop.f32.mrb[0].mxu0
        %v2278 = vadd.f32 %v2189, %v2277
        %2279 = vmatprep.mubr.f32.mxu0 %v423
        %2280 = vmatmul.mubr.f32.gmra.mrb[0].mxu0 %v422
        %v2281 = vpop.f32.mrb[0].mxu0
        %v2282 = vadd.f32 %v2193, %v2281
        %v2283 = vpop.f32.mrb[0].mxu0
        %v2284 = vadd.f32 %v2195, %v2283
        %2285 = vmatprep.mubr.f32.mxu0 %v427
        %2286 = vmatmul.mubr.f32.gmra.mrb[0].mxu0 %v426
        %v2287 = vpop.f32.mrb[0].mxu0
        %v2288 = vadd.f32 %v2199, %v2287
        %v2289 = vpop.f32.mrb[0].mxu0
        %v2290 = vadd.f32 %v2201, %v2289
        %2291 = vmatprep.mubr.f32.mxu0 %v431
        %2292 = vmatmul.mubr.f32.gmra.mrb[0].mxu0 %v430
        %v2293 = vpop.f32.mrb[0].mxu0
        %v2294 = vadd.f32 %v2205, %v2293
        %v2295 = vpop.f32.mrb[0].mxu0
        %v2296 = vadd.f32 %v2207, %v2295
        %2297 = vdwg.mxu0
        %2298 = vst [vmem:[%s311] sm:$0xff] %v2276
        %2299 = vst [vmem:[%s311 + $0x8] sm:$0xff] %v2278
        %2300 = vst [vmem:[%s311 + $0x10] sm:$0xff] %v2282
        %2301 = vst [vmem:[%s311 + $0x18] sm:$0xff] %v2284
        %2302 = vst [vmem:[%s311 + $0x20] sm:$0xff] %v2288
        %2303 = vst [vmem:[%s311 + $0x28] sm:$0xff] %v2290
        %2304 = vst [vmem:[%s311 + $0x30] sm:$0xff] %v2294
        %2305 = vst [vmem:[%s311 + $0x38] sm:$0xff] %v2296
        %v2306 = vld [vmem:[%s340] sm:$0xff]
        %v2307 = vld [vmem:[%s340 + $0x8] sm:$0xff]
        %v2308 = vld [vmem:[%s340 + $0x10] sm:$0xff]
        %v2309 = vld [vmem:[%s340 + $0x18] sm:$0xff]
        %v2310 = vld [vmem:[%s340 + $0x20] sm:$0xff]
        %v2311 = vld [vmem:[%s340 + $0x28] sm:$0xff]
        %v2312 = vld [vmem:[%s340 + $0x30] sm:$0xff]
        %v2313 = vld [vmem:[%s340 + $0x38] sm:$0xff]
        %2314 = vst [vmem:[%s311 + $0x40] sm:$0xff] %v2306
        %2315 = vst [vmem:[%s311 + $0x48] sm:$0xff] %v2307
        %2316 = vst [vmem:[%s311 + $0x50] sm:$0xff] %v2308
        %2317 = vst [vmem:[%s311 + $0x58] sm:$0xff] %v2309
        %2318 = vst [vmem:[%s311 + $0x60] sm:$0xff] %v2310
        %2319 = vst [vmem:[%s311 + $0x68] sm:$0xff] %v2311
        %2320 = vst [vmem:[%s311 + $0x70] sm:$0xff] %v2312
        %2321 = vst [vmem:[%s311 + $0x78] sm:$0xff] %v2313
        %s2322 = sand.u32 %s153, 1
        %s2323 = scalar_lea.sflag [#allocation3], %s2322
        %s2324 = sand.u32 %s153, 1
        %s2325 = smul.addr %s2324, 1024
        %s2326 = scalar_lea.vmem [#allocation2], %s2325
        %s2327 = sand.u32 %s181, 1
        %s2328 = scalar_lea.sflag [#allocation5], %s2327
        %s2329 = sand.u32 %s181, 1
        %s2330 = smul.addr %s2329, 128
        %s2331 = scalar_lea.vmem [#allocation4], %s2330
        // Predicated region
        $region37: #{tpu_custom_call.1} parent=35 // pred_check
          %p2332 = pneg %p163
        $region38: #{tpu_custom_call.1} parent=35 // pred_check_branch
          %2334 = sbr.rel (%p2332) target = $region40
        $region39: #{tpu_custom_call.1} parent=35 // pred_region
          %s2335 = smul.u32 2, %s28
          %s2337 = ssub.s32 16384, 16384
          %2338 = vsyncadd %s2323, %s2337
          %s2339 = smul.addr %s27, 128
          %s2340 = sadd.s32 %s2335, %s2339
          %s2341 = smul.addr %s2340, 128
          %s2342 = scalar_lea.hbm %s4, %s2341
          %s2343 = sshll.u32 %s2326, 4
          %s2344 = int_to_ptr.vmem [resolvable:$true] %s2343
          %2349 = dma.vmem_to_hbm [thread:$0]  %s2344, 16384, %s2342, %s2323, 256, 256, 16
        $region40: #{tpu_custom_call.1} parent=35 // pred_fallthru
          _
        // Predicated region
        $region41: #{tpu_custom_call.1} parent=35 // pred_check
          %p2350 = pneg %p191
        $region42: #{tpu_custom_call.1} parent=35 // pred_check_branch
          %2352 = sbr.rel (%p2350) target = $region44
        $region43: #{tpu_custom_call.1} parent=35 // pred_region
          %s2353 = smul.u32 2, %s28
          %s2355 = ssub.s32 2048, 2048
          %2356 = vsyncadd %s2328, %s2355
          %s2357 = smul.addr %s27, 16
          %s2358 = sadd.s32 %s2353, %s2357
          %s2359 = smul.addr %s2358, 128
          %s2360 = scalar_lea.hbm %s5, %s2359
          %s2361 = sshll.u32 %s2331, 4
          %s2362 = int_to_ptr.vmem [resolvable:$true] %s2361
          %2367 = dma.vmem_to_hbm [thread:$0]  %s2362, 2048, %s2360, %s2328, 256, 256, 16
        $region44: #{tpu_custom_call.1} parent=35 // pred_fallthru
          _
      $region36: #{tpu_custom_call.1} parent=5 // pred_fallthru
        _
      %p2368 = scmp.le.s32.totalorder 2, %s18
      // Predicated region
      $region45: #{tpu_custom_call.1} parent=5 // pred_check
        %p2369 = pneg %p2368
      $region46: #{tpu_custom_call.1} parent=5 // pred_check_branch
        %2371 = sbr.rel (%p2369) target = $region48
      $region47: #{tpu_custom_call.1} parent=5 // pred_region
        %s2372 = ssub.s32 %s18, 2
        // Predicated region
        $region49: #{tpu_custom_call.1} parent=47 // pred_check
          %p2373 = pneg %p169
        $region50: #{tpu_custom_call.1} parent=47 // pred_check_branch
          %2375 = sbr.rel (%p2373) target = $region52
        $region51: #{tpu_custom_call.1} parent=47 // pred_region
          %s2376 = sand.u32 %s154, 1
          %s2377 = scalar_lea.sflag [#allocation3], %s2376
          %s2378 = sand.u32 %s154, 1
          %s2379 = smul.addr %s2378, 1024
          %s2380 = scalar_lea.vmem [#allocation2], %s2379
          %2381 = dma.done %s2377, 16384
        $region52: #{tpu_custom_call.1} parent=47 // pred_fallthru
          _
        // Predicated region
        $region53: #{tpu_custom_call.1} parent=47 // pred_check
          %p2382 = pneg %p197
        $region54: #{tpu_custom_call.1} parent=47 // pred_check_branch
          %2384 = sbr.rel (%p2382) target = $region56
        $region55: #{tpu_custom_call.1} parent=47 // pred_region
          %s2385 = sand.u32 %s182, 1
          %s2386 = scalar_lea.sflag [#allocation5], %s2385
          %s2387 = sand.u32 %s182, 1
          %s2388 = smul.addr %s2387, 128
          %s2389 = scalar_lea.vmem [#allocation4], %s2388
          %2390 = dma.done %s2386, 2048
        $region56: #{tpu_custom_call.1} parent=47 // pred_fallthru
          _
      $region48: #{tpu_custom_call.1} parent=5 // pred_fallthru
        _
    $region6: #{tpu_custom_call.1} parent=1 // loop_footer
      %s22 = sadd.s32 1, %s18
    $region7: #{tpu_custom_call.1} parent=1 // loop_footer_branch
      %17 = sbr.rel target = $region3
    $region8: #{tpu_custom_call.1} parent=1 // loop_exit
      _
    %2391 = vsyncpa [#allocation3], 1
    %s2392 = scalar_lea.sflag [#allocation3], 1
    %2393 = vsyncpa %s2392, 1
    %2394 = vsyncpa [#allocation5], 1
    %s2395 = scalar_lea.sflag [#allocation5], 1
    %2396 = vsyncpa %s2395, 1

</llo_original>
